<compile_context>
chip_gen: v7x
topology: tpu7x:2x2x1
jax: 0.10.0
libtpu: 0.0.40
codegen_flags: <defaults>
</compile_context>

<pallas_src>
import functools

import numpy as np
import jax
import jax.numpy as jnp
from jax.experimental import pallas as pl
from jax.experimental.pallas import tpu as pltpu

# ---------------- small synthetic config ----------------
IMG_SIZE = 16
PATCH = 4
IMG_CH = 3
NUM_PATCHES = (IMG_SIZE // PATCH) ** 2          # 16
NUM_POS = NUM_PATCHES + 1                       # 17 (CLS + patches)
PATCH_DIM = IMG_CH * PATCH * PATCH              # 48 (im2col width)
V_HID = 32                                      # mm_hidden_size (vision hidden)
V_HEADS = 2
V_HEAD_DIM = V_HID // V_HEADS                   # 16
V_FFN = 64
V_LAYERS = 2
VISION_FEATURE_LAYER = -2                       # llava default
HID = 64                                        # text hidden_size
HEADS = 4
HEAD_DIM = HID // HEADS                         # 16
FFN = 128
VOCAB = 128
SEQ = 24                                        # tokens per request (prefill)
BS = 2
IMAGE_FEATURE_LEN = NUM_PATCHES                 # 'patch' select strategy

_F32 = jnp.float32
_BF16 = jnp.bfloat16
_NEG = -1e30


# ---------------- in-kernel helpers (pure jnp on values) ----------------
def _bf16(x):
    return x.astype(_BF16)


def _dot(a, b):
    # MXU matmul in bf16, f32 accumulation (no-op cast if already bf16).
    return jnp.dot(_bf16(a), _bf16(b), preferred_element_type=_F32)


def _dot_nt(a, b):
    # a @ b.T (contract the last dim of both).
    return jax.lax.dot_general(_bf16(a), _bf16(b), (((1,), (1,)), ((), ())),
                               preferred_element_type=_F32)


def _layernorm(x, g, b, eps=1e-5):
    mu = jnp.mean(x, axis=-1, keepdims=True)
    var = jnp.mean(jnp.square(x - mu), axis=-1, keepdims=True)
    return (x - mu) * jax.lax.rsqrt(var + eps) * g + b


def _rmsnorm(x, w, eps=1e-6):
    ms = jnp.mean(jnp.square(x), axis=-1, keepdims=True)
    return x * jax.lax.rsqrt(ms + eps) * w


def _softmax_rows(s):
    # s: (rows, cols) f32.  approx reciprocal -> EUP slot (inference-grade accuracy).
    s = s - jnp.max(s, axis=-1, keepdims=True)
    p = jnp.exp(s)
    return p * pl.reciprocal(jnp.sum(p, axis=-1, keepdims=True), approx=True)


def _rotate_half_heads(t, n_heads, head_dim):
    # Exact f32 per-head rotate_half on a (rows, n_heads*head_dim) tensor via static
    # lane slices + one concat (no MXU work, no bf16 rounding).
    half = head_dim // 2
    parts = []
    for h in range(n_heads):
        lo = t[:, h * head_dim: h * head_dim + half]
        hi = t[:, h * head_dim + half: (h + 1) * head_dim]
        parts.append(-hi)
        parts.append(lo)
    return jnp.concatenate(parts, axis=-1)


# ---------------- fused vision tower + projector kernel ----------------
# Single invocation over ALL images: rows = n_img * 17, cross-image attention is blocked
# by the precomputed additive bias.
def _vision_tower_kernel(patches_ref, base_ref, bias_ref, w_patch_ref, pre_g_ref, pre_b_ref,
                         ln1_g_ref, ln1_b_ref, wqkv_ref, bqkv_ref, wo_ref, bo_ref,
                         ln2_g_ref, ln2_b_ref, fc1_ref, fc1_b_ref, fc2_ref, fc2_b_ref,
                         pw1_ref, pb1_ref, pw2_ref, pb2_ref, o_ref, *, n_img, n_run):
    scale = jnp.float32(V_HEAD_DIM ** -0.5)
    bias = bias_ref[...]                                                   # (R, R) f32

    # embeddings: row 0 of each image's patch block is zero; `base` holds class+pos.
    emb = base_ref[...] + _dot(patches_ref[...], w_patch_ref[...])        # (R, V_HID)
    x = _layernorm(emb, pre_g_ref[...], pre_b_ref[...])                   # CLIP pre-LN

    # Only the layers up to vision_feature_layer (-2) are traced / computed.
    for l in range(n_run):
        # --- self-attention block ---
        a_in = _layernorm(x, ln1_g_ref[l], ln1_b_ref[l])
        qkv = _dot(a_in, wqkv_ref[l]) + bqkv_ref[l]                       # (R, 3*V_HID)
        q = _bf16(qkv[:, :V_HID] * scale)                                 # cast once
        k = _bf16(qkv[:, V_HID:2 * V_HID])
        v = _bf16(qkv[:, 2 * V_HID:3 * V_HID])
        oh = []
        for hh in range(V_HEADS):
            sl = slice(hh * V_HEAD_DIM, (hh + 1) * V_HEAD_DIM)
            s = _dot_nt(q[:, sl], k[:, sl]) + bias                        # (R, R) f32
            p = _softmax_rows(s)
            oh.append(_dot(p, v[:, sl]))                                  # (R, V_HEAD_DIM)
        # single lane-dense output projection (instead of V_HEADS K=16 matmuls)
        attn = _dot(jnp.concatenate(oh, axis=-1), wo_ref[l]) + bo_ref[l]
        x = x + attn
        # --- MLP block (quick-GELU) ---
        m_in = _layernorm(x, ln2_g_ref[l], ln2_b_ref[l])
        mid = _dot(m_in, fc1_ref[l]) + fc1_b_ref[l]                       # (R, V_FFN)
        mid = mid * jax.nn.sigmoid(1.702 * mid)
        x = x + _dot(mid, fc2_ref[l]) + fc2_b_ref[l]

    # vision_feature_select_strategy='patch': drop the CLS row of every image, then
    # run the multi_modal_projector on the packed (n_img*16, V_HID) slab.
    sel = jnp.concatenate(
        [x[i * NUM_POS + 1:(i + 1) * NUM_POS, :] for i in range(n_img)], axis=0)
    ph = _dot(sel, pw1_ref[...]) + pb1_ref[...]                           # (n_img*16, HID)
    # TODO(synk): HF projector uses exact erf-GELU; tanh approximation used here.
    ph = jax.nn.gelu(ph, approximate=True)
    o_ref[...] = _dot(ph, pw2_ref[...]) + pb2_ref[...]                    # (n_img*16, HID)


def vision_tower_projector(patches, base_full, bias, p, n_img):
    n_run = V_LAYERS + 1 + VISION_FEATURE_LAYER                            # layers actually needed
    wargs = [p["v_patch_w"], p["v_pre_ln_g"], p["v_pre_ln_b"],
             p["v_ln1_g"][:n_run], p["v_ln1_b"][:n_run], p["v_wqkv"][:n_run],
             p["v_bqkv"][:n_run], p["v_wo"][:n_run], p["v_bo"][:n_run],
             p["v_ln2_g"][:n_run], p["v_ln2_b"][:n_run],
             p["v_fc1"][:n_run], p["v_fc1_b"][:n_run], p["v_fc2"][:n_run], p["v_fc2_b"][:n_run],
             p["proj_w1"], p["proj_b1"], p["proj_w2"], p["proj_b2"]]

    R, d = n_img * NUM_POS, V_HID
    per_layer = (2 * R * d * 3 * d + V_HEADS * 2 * (2 * R * R * V_HEAD_DIM)
                 + 2 * R * d * d + 2 * (2 * R * d * V_FFN))
    flops = (2 * R * PATCH_DIM * d + n_run * per_layer
             + 2 * R * d * HID + 2 * R * HID * HID)
    trans = n_run * (V_HEADS * R * R + R * V_FFN) + R * HID
    bytes_acc = (int(sum(int(a.size) * a.dtype.itemsize for a in wargs))
                 + int(patches.size) * 2 + int(base_full.size) * 4 + int(bias.size) * 4
                 + n_img * NUM_PATCHES * HID * 4)

    kernel = functools.partial(_vision_tower_kernel, n_img=n_img, n_run=n_run)
    return pl.pallas_call(
        kernel,
        out_shape=jax.ShapeDtypeStruct((n_img * NUM_PATCHES, HID), _F32),
        cost_estimate=pl.CostEstimate(flops=int(flops), transcendentals=int(trans),
                                      bytes_accessed=int(bytes_acc)),
    )(patches, base_full, bias, *wargs)


def encode_images(pixel_values, params):
    """pixel_values: (n_img, 3, 16, 16) NCHW -> packed image features (n_img*16, HID)."""
    n = pixel_values.shape[0]
    # im2col for the stride-P patch conv (layout glue; the matmul is in the kernel).
    x = pixel_values.reshape(n, IMG_CH, IMG_SIZE // PATCH, PATCH, IMG_SIZE // PATCH, PATCH)
    x = x.transpose(0, 2, 4, 1, 3, 5).reshape(n, NUM_PATCHES, PATCH_DIM)
    # prepend a zero row per image so the patch projection lands on token rows 1..16
    patches = jnp.concatenate(
        [jnp.zeros((n, 1, PATCH_DIM), _F32), x.astype(_F32)], axis=1)
    patches = patches.reshape(n * NUM_POS, PATCH_DIM).astype(_BF16)        # stream in bf16
    # class + position embedding skeleton, tiled over the folded image rows
    base = jnp.concatenate(
        [(params["v_class"] + params["v_pos"][0])[None, :], params["v_pos"][1:]], axis=0)
    base_full = jnp.tile(base, (n, 1))                                     # (n*17, V_HID)
    # block-diagonal attention bias: no cross-image attention after batch folding
    R = n * NUM_POS
    bias = np.full((R, R), _NEG, np.float32)
    for i in range(n):
        bias[i * NUM_POS:(i + 1) * NUM_POS, i * NUM_POS:(i + 1) * NUM_POS] = 0.0
    return vision_tower_projector(patches, base_full, jnp.asarray(bias), params, n)


# ---------------- fused LLaMA decoder + lm_head kernel ----------------
# Single invocation over ALL prefill requests: rows = n_req*SEQ, block-diagonal causal
# bias keeps attention inside each request.  Image features are scattered into the
# embeddings in VMEM (offsets read from SMEM).
def _llama_kernel(emb_ref, cos_ref, sin_ref, bias_ref, in_norm_ref, wqkv_ref, wo_ref,
                  post_norm_ref, wgu_ref, wd_ref, final_norm_ref, lm_head_ref,
                  *rest, n_img):
    if n_img > 0:
        feat_ref, off_ref, o_ref, x_scr = rest
    else:
        o_ref, x_scr = rest

    emb = emb_ref[...]                                                    # (T, HID) f32
    if n_img > 0:
        # in-VMEM scatter of image features at token offsets (no HBM round trip)
        x_scr[...] = emb
        for im in range(n_img):
            x_scr[pl.ds(off_ref[im], IMAGE_FEATURE_LEN), :] = (
                feat_ref[im * IMAGE_FEATURE_LEN:(im + 1) * IMAGE_FEATURE_LEN, :])
        x0 = x_scr[...]
    else:
        x0 = emb

    cos = cos_ref[...]                                                    # (T, HID) f32
    sin = sin_ref[...]
    bias = bias_ref[...]                                                  # (T, T) additive
    scale = jnp.float32(HEAD_DIM ** -0.5)

    # ---- decoder layer ----
    h = _rmsnorm(x0, in_norm_ref[...])
    qkv = _dot(h, wqkv_ref[...])                                          # (T, 3*HID) f32
    q = qkv[:, :HID]
    k = qkv[:, HID:2 * HID]
    v = qkv[:, 2 * HID:3 * HID]
    # RoPE on the full width in one shot (exact f32 rotate_half), scale folded into q,
    # then a single bf16 cast per tensor.
    q = _bf16((q * cos + _rotate_half_heads(q, HEADS, HEAD_DIM) * sin) * scale)
    k = _bf16(k * cos + _rotate_half_heads(k, HEADS, HEAD_DIM) * sin)
    v = _bf16(v)

    oh = []
    for hh in range(HEADS):
        sl = slice(hh * HEAD_DIM, (hh + 1) * HEAD_DIM)
        s = _dot_nt(q[:, sl], k[:, sl]) + bias                            # (T, T) f32
        p = _softmax_rows(s)
        oh.append(_dot(p, v[:, sl]))                                      # (T, HEAD_DIM)
    # single lane-dense output projection (instead of HEADS K=16 matmuls)
    attn = _dot(jnp.concatenate(oh, axis=-1), wo_ref[...])
    x1 = x0 + attn

    h2 = _rmsnorm(x1, post_norm_ref[...])
    gu = _dot(h2, wgu_ref[...])                                           # (T, 2*FFN)
    g = gu[:, :FFN]
    u = gu[:, FFN:2 * FFN]
    x2 = x1 + _dot(g * jax.nn.sigmoid(g) * u, wd_ref[...])                # SwiGLU

    # ---- final norm + lm_head ----
    xf = _rmsnorm(x2, final_norm_ref[...])
    o_ref[...] = _dot(xf, lm_head_ref[...])                               # (T, VOCAB)


def _rope_cos_sin(positions, dim, base=10000.0):
    inv_freq = 1.0 / (base ** (jnp.arange(0, dim, 2, dtype=_F32) / dim))
    ang = positions.astype(_F32)[:, None] * inv_freq[None, :]             # (T, dim/2)
    cos = jnp.concatenate([jnp.cos(ang), jnp.cos(ang)], axis=-1)
    sin = jnp.concatenate([jnp.sin(ang), jnp.sin(ang)], axis=-1)
    return cos, sin                                                       # (T, dim)


def llama_forward(input_embeds, positions, p, image_features=None, scatter_offsets=None):
    T = input_embeds.shape[0]
    n_req = T // SEQ
    n_img = 0 if scatter_offsets is None else int(scatter_offsets.shape[0])

    cos, sin = _rope_cos_sin(positions, HEAD_DIM)
    cos_full = jnp.tile(cos, (1, HEADS))                                  # heads share cos/sin
    sin_full = jnp.tile(sin, (1, HEADS))

    # block-diagonal causal additive bias, hoisted out of the kernel (host precompute)
    bias = np.full((T, T), _NEG, np.float32)
    for r in range(n_req):
        blk = np.triu(np.full((SEQ, SEQ), _NEG, np.float32), k=1)
        bias[r * SEQ:(r + 1) * SEQ, r * SEQ:(r + 1) * SEQ] = blk
    bias = jnp.asarray(bias)

    wargs = [p["in_norm"], p["wqkv"], p["wo"], p["post_norm"],
             p["w_gate_up"], p["wd"], p["final_norm"], p["lm_head"]]
    args = [input_embeds, cos_full, sin_full, bias] + wargs
    vmem = pl.BlockSpec(memory_space=pltpu.MemorySpace.VMEM)
    in_specs = [vmem] * len(args)
    if n_img > 0:
        args += [image_features, scatter_offsets]
        in_specs += [vmem, pl.BlockSpec(memory_space=pltpu.MemorySpace.SMEM)]

    flops = (2 * T * HID * 3 * HID + HEADS * 2 * (2 * T * T * HEAD_DIM)
             + 2 * T * HID * HID + 2 * T * HID * 2 * FFN
             + 2 * T * FFN * HID + 2 * T * HID * VOCAB)
    trans = HEADS * T * T + T * FFN
    bytes_acc = (int(sum(int(a.size) * a.dtype.itemsize for a in wargs))
                 + T * HID * 4 + 2 * T * HID * 4 + T * T * 4
                 + n_img * IMAGE_FEATURE_LEN * HID * 4 + T * VOCAB * 4)

    kernel = functools.partial(_llama_kernel, n_img=n_img)
    # NOTE: no grid -- batch is folded into the row dim (best for single-TC v5e/v6e).
    # On v7x with larger batches, shard requests across the 2 TensorCores instead.
    return pl.pallas_call(
        kernel,
        out_shape=jax.ShapeDtypeStruct((T, VOCAB), _F32),
        in_specs=in_specs,
        out_specs=pl.BlockSpec(memory_space=pltpu.MemorySpace.VMEM),
        scratch_shapes=[pltpu.VMEM((T, HID), _F32)],
        cost_estimate=pl.CostEstimate(flops=int(flops), transcendentals=int(trans),
                                      bytes_accessed=int(bytes_acc)),
    )(*args)


# ---------------- LlavaLlamaForCausalLM.forward (EXTEND path) ----------------
def llava_forward(params, input_ids, positions, extend_start_loc,
                  pixel_values_list, image_sizes, image_offsets):
    bs = BS
    del image_sizes  # only needed for the 'spatial'/'anyres' merge branch (not implemented)

    # embed_tokens gather (kept as a single XLA gather; exact lookup)
    input_embeds = jnp.take(params["embed_tokens"], input_ids, axis=0)    # (T, HID)

    # host-side control flow (mirrors the reference, uses host numpy inputs -> no sync)
    pos_np = np.asarray(positions)
    start_np = np.asarray(extend_start_loc)
    need_vision = pos_np[start_np] < IMAGE_FEATURE_LEN
    has_pixel = np.array([pixel_values_list[i] is not None for i in range(bs)])
    need_vision = need_vision & has_pixel

    if need_vision.any():
        pv = [pixel_values_list[i] for i in range(bs) if need_vision[i]]
        if pv[0].ndim == 4:
            concat_images = jnp.asarray(np.concatenate(pv, axis=0), dtype=_F32)
        else:
            concat_images = jnp.asarray(np.array(pv), dtype=_F32)
        # packed (n_img_total*16, HID) slab, image order == concat order == scatter order
        feats_flat = encode_images(concat_images, params)
        # TODO(synk): 'spatial'/'anyres' mm_patch_merge_type branch not implemented (flat only).
        rows = []
        for i in range(bs):
            if not need_vision[i]:
                continue
            start_idx = int(start_np[i])
            for image_off in image_offsets[i]:
                rows.append(start_idx + int(image_off))
        offsets = jnp.asarray(np.asarray(rows, dtype=np.int32))
        return llama_forward(input_embeds, jnp.asarray(positions), params,
                             image_features=feats_flat, scatter_offsets=offsets)

    # TODO(synk): DECODE forward mode / KV-cache path not implemented (extend only).
    return llama_forward(input_embeds, jnp.asarray(positions), params)


# ---------------- deterministic parameter init (fused-weight layout, bf16 matmul weights) ------
def init_params(key):
    keys = iter(jax.random.split(key, 64))

    def nrm(shape, scale=0.02, dtype=_F32):
        return (scale * jax.random.normal(next(keys), shape, dtype=_F32)).astype(dtype)

    p = {}
    # vision embeddings (weights stored (in, out) / im2col layout)
    p["v_patch_w"] = nrm((PATCH_DIM, V_HID), dtype=_BF16)
    p["v_class"] = nrm((V_HID,))
    p["v_pos"] = nrm((NUM_POS, V_HID))
    p["v_pre_ln_g"] = jnp.ones((1, V_HID), _F32)
    p["v_pre_ln_b"] = jnp.zeros((1, V_HID), _F32)
    # vision encoder layers, stacked along a leading layer axis
    p["v_ln1_g"] = jnp.ones((V_LAYERS, 1, V_HID), _F32)
    p["v_ln1_b"] = jnp.zeros((V_LAYERS, 1, V_HID), _F32)
    p["v_wqkv"] = nrm((V_LAYERS, V_HID, 3 * V_HID), dtype=_BF16)
    p["v_bqkv"] = nrm((V_LAYERS, 1, 3 * V_HID))
    p["v_wo"] = nrm((V_LAYERS, V_HID, V_HID), dtype=_BF16)
    p["v_bo"] = nrm((V_LAYERS, 1, V_HID))
    p["v_ln2_g"] = jnp.ones((V_LAYERS, 1, V_HID), _F32)
    p["v_ln2_b"] = jnp.zeros((V_LAYERS, 1, V_HID), _F32)
    p["v_fc1"] = nrm((V_LAYERS, V_HID, V_FFN), dtype=_BF16)
    p["v_fc1_b"] = nrm((V_LAYERS, 1, V_FFN))
    p["v_fc2"] = nrm((V_LAYERS, V_FFN, V_HID), dtype=_BF16)
    p["v_fc2_b"] = nrm((V_LAYERS, 1, V_HID))
    # multi_modal_projector
    p["proj_w1"] = nrm((V_HID, HID), dtype=_BF16)
    p["proj_b1"] = nrm((1, HID))
    p["proj_w2"] = nrm((HID, HID), dtype=_BF16)
    p["proj_b2"] = nrm((1, HID))
    # language model (fused QKV and gate+up)
    p["embed_tokens"] = nrm((VOCAB, HID))
    p["in_norm"] = jnp.ones((1, HID), _F32)
    p["wqkv"] = nrm((HID, 3 * HID), dtype=_BF16)
    p["wo"] = nrm((HID, HID), dtype=_BF16)
    p["post_norm"] = jnp.ones((1, HID), _F32)
    p["w_gate_up"] = nrm((HID, 2 * FFN), dtype=_BF16)
    p["wd"] = nrm((FFN, HID), dtype=_BF16)
    p["final_norm"] = jnp.ones((1, HID), _F32)
    p["lm_head"] = nrm((HID, VOCAB), dtype=_BF16)
    return p


if __name__ == "__main__":
    key = jax.random.PRNGKey(0)
    kp, kpix, kid = jax.random.split(key, 3)
    params = init_params(kp)

    # 2 requests, each with one image of shape (1, 3, 16, 16) in NCHW (PyTorch conv layout)
    pixel_values = [
        np.asarray(jax.random.normal(jax.random.fold_in(kpix, i),
                                     (1, IMG_CH, IMG_SIZE, IMG_SIZE), dtype=_F32))
        for i in range(BS)
    ]
    image_sizes = [[(IMG_SIZE, IMG_SIZE)] for _ in range(BS)]
    image_offsets = [[2], [2]]           # image tokens occupy [2, 2+16) in each request

    input_ids = jax.random.randint(kid, (BS * SEQ,), 0, VOCAB, dtype=jnp.int32)
    positions = np.concatenate([np.arange(SEQ, dtype=np.int32)] * BS)
    extend_start_loc = np.array([0, SEQ], dtype=np.int32)

    logits = llava_forward(params, input_ids, positions, extend_start_loc,
                           pixel_values, image_sizes, image_offsets)
    logits = jax.block_until_ready(logits)
    assert logits.shape == (BS * SEQ, VOCAB)
    assert np.isfinite(np.asarray(logits)).all()
    print("KERNEL_OK")
</pallas_src>

<mosaic_0001>
module attributes {stable_mosaic.version = 11 : i64} {
  func.func @_vision_tower_kernel(%arg0: memref<34x48xbf16, #tpu.memory_space<vmem>>, %arg1: memref<34x32xf32, #tpu.memory_space<vmem>>, %arg2: memref<34x34xf32, #tpu.memory_space<vmem>>, %arg3: memref<48x32xbf16, #tpu.memory_space<vmem>>, %arg4: memref<1x32xf32, #tpu.memory_space<vmem>>, %arg5: memref<1x32xf32, #tpu.memory_space<vmem>>, %arg6: memref<1x1x32xf32, #tpu.memory_space<vmem>>, %arg7: memref<1x1x32xf32, #tpu.memory_space<vmem>>, %arg8: memref<1x32x96xbf16, #tpu.memory_space<vmem>>, %arg9: memref<1x1x96xf32, #tpu.memory_space<vmem>>, %arg10: memref<1x32x32xbf16, #tpu.memory_space<vmem>>, %arg11: memref<1x1x32xf32, #tpu.memory_space<vmem>>, %arg12: memref<1x1x32xf32, #tpu.memory_space<vmem>>, %arg13: memref<1x1x32xf32, #tpu.memory_space<vmem>>, %arg14: memref<1x32x64xbf16, #tpu.memory_space<vmem>>, %arg15: memref<1x1x64xf32, #tpu.memory_space<vmem>>, %arg16: memref<1x64x32xbf16, #tpu.memory_space<vmem>>, %arg17: memref<1x1x32xf32, #tpu.memory_space<vmem>>, %arg18: memref<32x64xbf16, #tpu.memory_space<vmem>>, %arg19: memref<1x64xf32, #tpu.memory_space<vmem>>, %arg20: memref<64x64xbf16, #tpu.memory_space<vmem>>, %arg21: memref<1x64xf32, #tpu.memory_space<vmem>>, %arg22: memref<32x64xf32, #tpu.memory_space<vmem>>) attributes {dimension_semantics = [], scalar_prefetch = 0 : i64, scratch_operands = 0 : i64, tpu.core_type = #tpu.core_type<tc>} {
    %c0 = arith.constant 0 : index
    %c0_0 = arith.constant 0 : index
    %0 = vector.load %arg2[%c0, %c0_0] : memref<34x34xf32, #tpu.memory_space<vmem>>, vector<34x34xf32>
    %c0_1 = arith.constant 0 : index
    %c0_2 = arith.constant 0 : index
    %1 = vector.load %arg1[%c0_1, %c0_2] : memref<34x32xf32, #tpu.memory_space<vmem>>, vector<34x32xf32>
    %c0_3 = arith.constant 0 : index
    %c0_4 = arith.constant 0 : index
    %2 = vector.load %arg0[%c0_3, %c0_4] : memref<34x48xbf16, #tpu.memory_space<vmem>>, vector<34x48xbf16>
    %c0_5 = arith.constant 0 : index
    %c0_6 = arith.constant 0 : index
    %3 = vector.load %arg3[%c0_5, %c0_6] : memref<48x32xbf16, #tpu.memory_space<vmem>>, vector<48x32xbf16>
    %cst = arith.constant dense<0.000000e+00> : vector<34x32xf32>
    %4 = tpu.matmul %2, %3, %cst {dimension_numbers = #tpu.dot_dimension_numbers<[1], [0], [0], [1], [0, 0, 1, 1], [], []>} : vector<34x48xbf16>, vector<48x32xbf16>, vector<34x32xf32> -> vector<34x32xf32>
    %5 = arith.addf %1, %4 : vector<34x32xf32>
    %c0_7 = arith.constant 0 : index
    %c0_8 = arith.constant 0 : index
    %6 = vector.load %arg4[%c0_7, %c0_8] : memref<1x32xf32, #tpu.memory_space<vmem>>, vector<1x32xf32>
    %c0_9 = arith.constant 0 : index
    %c0_10 = arith.constant 0 : index
    %7 = vector.load %arg5[%c0_9, %c0_10] : memref<1x32xf32, #tpu.memory_space<vmem>>, vector<1x32xf32>
    %cst_11 = arith.constant dense<0.000000e+00> : vector<34xf32>
    %8 = vector.multi_reduction <add>, %5, %cst_11 [1] : vector<34x32xf32> to vector<34xf32>
    %9 = vector.shape_cast %8 : vector<34xf32> to vector<34x1xf32>
    %cst_12 = arith.constant 3.200000e+01 : f32
    %10 = vector.broadcast %cst_12 : f32 to vector<34x1xf32>
    %11 = arith.divf %9, %10 : vector<34x1xf32>
    %12 = vector.broadcast %11 : vector<34x1xf32> to vector<34x32xf32>
    %13 = arith.subf %5, %12 : vector<34x32xf32>
    %14 = arith.mulf %13, %13 : vector<34x32xf32>
    %cst_13 = arith.constant dense<0.000000e+00> : vector<34xf32>
    %15 = vector.multi_reduction <add>, %14, %cst_13 [1] : vector<34x32xf32> to vector<34xf32>
    %16 = vector.shape_cast %15 : vector<34xf32> to vector<34x1xf32>
    %cst_14 = arith.constant 3.200000e+01 : f32
    %17 = vector.broadcast %cst_14 : f32 to vector<34x1xf32>
    %18 = arith.divf %16, %17 : vector<34x1xf32>
    %19 = vector.broadcast %11 : vector<34x1xf32> to vector<34x32xf32>
    %20 = arith.subf %5, %19 : vector<34x32xf32>
    %cst_15 = arith.constant 9.99999974E-6 : f32
    %21 = vector.broadcast %cst_15 : f32 to vector<34x1xf32>
    %22 = arith.addf %18, %21 : vector<34x1xf32>
    %23 = math.rsqrt %22 : vector<34x1xf32>
    %24 = vector.broadcast %23 : vector<34x1xf32> to vector<34x32xf32>
    %25 = arith.mulf %20, %24 : vector<34x32xf32>
    %26 = vector.broadcast %6 : vector<1x32xf32> to vector<34x32xf32>
    %27 = arith.mulf %25, %26 : vector<34x32xf32>
    %28 = vector.broadcast %7 : vector<1x32xf32> to vector<34x32xf32>
    %29 = arith.addf %27, %28 : vector<34x32xf32>
    %c0_16 = arith.constant 0 : index
    %c0_17 = arith.constant 0 : index
    %c0_18 = arith.constant 0 : index
    %30 = vector.load %arg6[%c0_16, %c0_17, %c0_18] : memref<1x1x32xf32, #tpu.memory_space<vmem>>, vector<1x1x32xf32>
    %31 = vector.shape_cast %30 : vector<1x1x32xf32> to vector<1x32xf32>
    %c0_19 = arith.constant 0 : index
    %c0_20 = arith.constant 0 : index
    %c0_21 = arith.constant 0 : index
    %32 = vector.load %arg7[%c0_19, %c0_20, %c0_21] : memref<1x1x32xf32, #tpu.memory_space<vmem>>, vector<1x1x32xf32>
    %33 = vector.shape_cast %32 : vector<1x1x32xf32> to vector<1x32xf32>
    %cst_22 = arith.constant dense<0.000000e+00> : vector<34xf32>
    %34 = vector.multi_reduction <add>, %29, %cst_22 [1] : vector<34x32xf32> to vector<34xf32>
    %35 = vector.shape_cast %34 : vector<34xf32> to vector<34x1xf32>
    %cst_23 = arith.constant 3.200000e+01 : f32
    %36 = vector.broadcast %cst_23 : f32 to vector<34x1xf32>
    %37 = arith.divf %35, %36 : vector<34x1xf32>
    %38 = vector.broadcast %37 : vector<34x1xf32> to vector<34x32xf32>
    %39 = arith.subf %29, %38 : vector<34x32xf32>
    %40 = arith.mulf %39, %39 : vector<34x32xf32>
    %cst_24 = arith.constant dense<0.000000e+00> : vector<34xf32>
    %41 = vector.multi_reduction <add>, %40, %cst_24 [1] : vector<34x32xf32> to vector<34xf32>
    %42 = vector.shape_cast %41 : vector<34xf32> to vector<34x1xf32>
    %cst_25 = arith.constant 3.200000e+01 : f32
    %43 = vector.broadcast %cst_25 : f32 to vector<34x1xf32>
    %44 = arith.divf %42, %43 : vector<34x1xf32>
    %45 = vector.broadcast %37 : vector<34x1xf32> to vector<34x32xf32>
    %46 = arith.subf %29, %45 : vector<34x32xf32>
    %cst_26 = arith.constant 9.99999974E-6 : f32
    %47 = vector.broadcast %cst_26 : f32 to vector<34x1xf32>
    %48 = arith.addf %44, %47 : vector<34x1xf32>
    %49 = math.rsqrt %48 : vector<34x1xf32>
    %50 = vector.broadcast %49 : vector<34x1xf32> to vector<34x32xf32>
    %51 = arith.mulf %46, %50 : vector<34x32xf32>
    %52 = vector.broadcast %31 : vector<1x32xf32> to vector<34x32xf32>
    %53 = arith.mulf %51, %52 : vector<34x32xf32>
    %54 = vector.broadcast %33 : vector<1x32xf32> to vector<34x32xf32>
    %55 = arith.addf %53, %54 : vector<34x32xf32>
    %c0_27 = arith.constant 0 : index
    %c0_28 = arith.constant 0 : index
    %c0_29 = arith.constant 0 : index
    %56 = vector.load %arg8[%c0_27, %c0_28, %c0_29] : memref<1x32x96xbf16, #tpu.memory_space<vmem>>, vector<1x32x96xbf16>
    %57 = vector.shape_cast %56 : vector<1x32x96xbf16> to vector<32x96xbf16>
    %58 = arith.truncf %55 : vector<34x32xf32> to vector<34x32xbf16>
    %cst_30 = arith.constant dense<0.000000e+00> : vector<34x96xf32>
    %59 = tpu.matmul %58, %57, %cst_30 {dimension_numbers = #tpu.dot_dimension_numbers<[1], [0], [0], [1], [0, 0, 1, 1], [], []>} : vector<34x32xbf16>, vector<32x96xbf16>, vector<34x96xf32> -> vector<34x96xf32>
    %c0_31 = arith.constant 0 : index
    %c0_32 = arith.constant 0 : index
    %c0_33 = arith.constant 0 : index
    %60 = vector.load %arg9[%c0_31, %c0_32, %c0_33] : memref<1x1x96xf32, #tpu.memory_space<vmem>>, vector<1x1x96xf32>
    %61 = vector.shape_cast %60 : vector<1x1x96xf32> to vector<1x96xf32>
    %62 = vector.broadcast %61 : vector<1x96xf32> to vector<34x96xf32>
    %63 = arith.addf %59, %62 : vector<34x96xf32>
    %64 = vector.extract_strided_slice %63 {offsets = [0, 0], sizes = [34, 32], strides = [1, 1]} : vector<34x96xf32> to vector<34x32xf32>
    %cst_34 = arith.constant 2.500000e-01 : f32
    %65 = vector.broadcast %cst_34 : f32 to vector<34x32xf32>
    %66 = arith.mulf %64, %65 : vector<34x32xf32>
    %67 = arith.truncf %66 : vector<34x32xf32> to vector<34x32xbf16>
    %68 = vector.extract_strided_slice %63 {offsets = [0, 32], sizes = [34, 32], strides = [1, 1]} : vector<34x96xf32> to vector<34x32xf32>
    %69 = arith.truncf %68 : vector<34x32xf32> to vector<34x32xbf16>
    %70 = vector.extract_strided_slice %63 {offsets = [0, 64], sizes = [34, 32], strides = [1, 1]} : vector<34x96xf32> to vector<34x32xf32>
    %71 = arith.truncf %70 : vector<34x32xf32> to vector<34x32xbf16>
    %72 = vector.extract_strided_slice %67 {offsets = [0, 0], sizes = [34, 16], strides = [1, 1]} : vector<34x32xbf16> to vector<34x16xbf16>
    %73 = vector.extract_strided_slice %69 {offsets = [0, 0], sizes = [34, 16], strides = [1, 1]} : vector<34x32xbf16> to vector<34x16xbf16>
    %cst_35 = arith.constant dense<0.000000e+00> : vector<34x34xf32>
    %74 = tpu.matmul %72, %73, %cst_35 {dimension_numbers = #tpu.dot_dimension_numbers<[1], [1], [0], [0], [0, 0, 1, 0], [], []>} : vector<34x16xbf16>, vector<34x16xbf16>, vector<34x34xf32> -> vector<34x34xf32>
    %75 = arith.addf %74, %0 : vector<34x34xf32>
    %cst_36 = arith.constant dense<0xFF800000> : vector<34xf32>
    %76 = vector.multi_reduction <maximumf>, %75, %cst_36 [1] : vector<34x34xf32> to vector<34xf32>
    %77 = vector.shape_cast %76 : vector<34xf32> to vector<34x1xf32>
    %78 = vector.broadcast %77 : vector<34x1xf32> to vector<34x34xf32>
    %79 = arith.subf %75, %78 : vector<34x34xf32>
    %80 = math.exp %79 : vector<34x34xf32>
    %cst_37 = arith.constant dense<0.000000e+00> : vector<34xf32>
    %81 = vector.multi_reduction <add>, %80, %cst_37 [1] : vector<34x34xf32> to vector<34xf32>
    %82 = vector.shape_cast %81 : vector<34xf32> to vector<34x1xf32>
    %83 = tpu.reciprocal %82 {approx = true} : vector<34x1xf32> -> vector<34x1xf32>
    %84 = vector.broadcast %83 : vector<34x1xf32> to vector<34x34xf32>
    %85 = arith.mulf %80, %84 : vector<34x34xf32>
    %86 = vector.extract_strided_slice %71 {offsets = [0, 0], sizes = [34, 16], strides = [1, 1]} : vector<34x32xbf16> to vector<34x16xbf16>
    %87 = arith.truncf %85 : vector<34x34xf32> to vector<34x34xbf16>
    %cst_38 = arith.constant dense<0.000000e+00> : vector<34x16xf32>
    %88 = tpu.matmul %87, %86, %cst_38 {dimension_numbers = #tpu.dot_dimension_numbers<[1], [0], [0], [1], [0, 0, 1, 1], [], []>} : vector<34x34xbf16>, vector<34x16xbf16>, vector<34x16xf32> -> vector<34x16xf32>
    %89 = vector.extract_strided_slice %67 {offsets = [0, 16], sizes = [34, 16], strides = [1, 1]} : vector<34x32xbf16> to vector<34x16xbf16>
    %90 = vector.extract_strided_slice %69 {offsets = [0, 16], sizes = [34, 16], strides = [1, 1]} : vector<34x32xbf16> to vector<34x16xbf16>
    %cst_39 = arith.constant dense<0.000000e+00> : vector<34x34xf32>
    %91 = tpu.matmul %89, %90, %cst_39 {dimension_numbers = #tpu.dot_dimension_numbers<[1], [1], [0], [0], [0, 0, 1, 0], [], []>} : vector<34x16xbf16>, vector<34x16xbf16>, vector<34x34xf32> -> vector<34x34xf32>
    %92 = arith.addf %91, %0 : vector<34x34xf32>
    %cst_40 = arith.constant dense<0xFF800000> : vector<34xf32>
    %93 = vector.multi_reduction <maximumf>, %92, %cst_40 [1] : vector<34x34xf32> to vector<34xf32>
    %94 = vector.shape_cast %93 : vector<34xf32> to vector<34x1xf32>
    %95 = vector.broadcast %94 : vector<34x1xf32> to vector<34x34xf32>
    %96 = arith.subf %92, %95 : vector<34x34xf32>
    %97 = math.exp %96 : vector<34x34xf32>
    %cst_41 = arith.constant dense<0.000000e+00> : vector<34xf32>
    %98 = vector.multi_reduction <add>, %97, %cst_41 [1] : vector<34x34xf32> to vector<34xf32>
    %99 = vector.shape_cast %98 : vector<34xf32> to vector<34x1xf32>
    %100 = tpu.reciprocal %99 {approx = true} : vector<34x1xf32> -> vector<34x1xf32>
    %101 = vector.broadcast %100 : vector<34x1xf32> to vector<34x34xf32>
    %102 = arith.mulf %97, %101 : vector<34x34xf32>
    %103 = vector.extract_strided_slice %71 {offsets = [0, 16], sizes = [34, 16], strides = [1, 1]} : vector<34x32xbf16> to vector<34x16xbf16>
    %104 = arith.truncf %102 : vector<34x34xf32> to vector<34x34xbf16>
    %cst_42 = arith.constant dense<0.000000e+00> : vector<34x16xf32>
    %105 = tpu.matmul %104, %103, %cst_42 {dimension_numbers = #tpu.dot_dimension_numbers<[1], [0], [0], [1], [0, 0, 1, 1], [], []>} : vector<34x34xbf16>, vector<34x16xbf16>, vector<34x16xf32> -> vector<34x16xf32>
    %106 = tpu.concatenate %88, %105 in 1 : vector<34x16xf32>, vector<34x16xf32> -> vector<34x32xf32>
    %c0_43 = arith.constant 0 : index
    %c0_44 = arith.constant 0 : index
    %c0_45 = arith.constant 0 : index
    %107 = vector.load %arg10[%c0_43, %c0_44, %c0_45] : memref<1x32x32xbf16, #tpu.memory_space<vmem>>, vector<1x32x32xbf16>
    %108 = vector.shape_cast %107 : vector<1x32x32xbf16> to vector<32x32xbf16>
    %109 = arith.truncf %106 : vector<34x32xf32> to vector<34x32xbf16>
    %cst_46 = arith.constant dense<0.000000e+00> : vector<34x32xf32>
    %110 = tpu.matmul %109, %108, %cst_46 {dimension_numbers = #tpu.dot_dimension_numbers<[1], [0], [0], [1], [0, 0, 1, 1], [], []>} : vector<34x32xbf16>, vector<32x32xbf16>, vector<34x32xf32> -> vector<34x32xf32>
    %c0_47 = arith.constant 0 : index
    %c0_48 = arith.constant 0 : index
    %c0_49 = arith.constant 0 : index
    %111 = vector.load %arg11[%c0_47, %c0_48, %c0_49] : memref<1x1x32xf32, #tpu.memory_space<vmem>>, vector<1x1x32xf32>
    %112 = vector.shape_cast %111 : vector<1x1x32xf32> to vector<1x32xf32>
    %113 = vector.broadcast %112 : vector<1x32xf32> to vector<34x32xf32>
    %114 = arith.addf %110, %113 : vector<34x32xf32>
    %115 = arith.addf %29, %114 : vector<34x32xf32>
    %c0_50 = arith.constant 0 : index
    %c0_51 = arith.constant 0 : index
    %c0_52 = arith.constant 0 : index
    %116 = vector.load %arg12[%c0_50, %c0_51, %c0_52] : memref<1x1x32xf32, #tpu.memory_space<vmem>>, vector<1x1x32xf32>
    %117 = vector.shape_cast %116 : vector<1x1x32xf32> to vector<1x32xf32>
    %c0_53 = arith.constant 0 : index
    %c0_54 = arith.constant 0 : index
    %c0_55 = arith.constant 0 : index
    %118 = vector.load %arg13[%c0_53, %c0_54, %c0_55] : memref<1x1x32xf32, #tpu.memory_space<vmem>>, vector<1x1x32xf32>
    %119 = vector.shape_cast %118 : vector<1x1x32xf32> to vector<1x32xf32>
    %cst_56 = arith.constant dense<0.000000e+00> : vector<34xf32>
    %120 = vector.multi_reduction <add>, %115, %cst_56 [1] : vector<34x32xf32> to vector<34xf32>
    %121 = vector.shape_cast %120 : vector<34xf32> to vector<34x1xf32>
    %cst_57 = arith.constant 3.200000e+01 : f32
    %122 = vector.broadcast %cst_57 : f32 to vector<34x1xf32>
    %123 = arith.divf %121, %122 : vector<34x1xf32>
    %124 = vector.broadcast %123 : vector<34x1xf32> to vector<34x32xf32>
    %125 = arith.subf %115, %124 : vector<34x32xf32>
    %126 = arith.mulf %125, %125 : vector<34x32xf32>
    %cst_58 = arith.constant dense<0.000000e+00> : vector<34xf32>
    %127 = vector.multi_reduction <add>, %126, %cst_58 [1] : vector<34x32xf32> to vector<34xf32>
    %128 = vector.shape_cast %127 : vector<34xf32> to vector<34x1xf32>
    %cst_59 = arith.constant 3.200000e+01 : f32
    %129 = vector.broadcast %cst_59 : f32 to vector<34x1xf32>
    %130 = arith.divf %128, %129 : vector<34x1xf32>
    %131 = vector.broadcast %123 : vector<34x1xf32> to vector<34x32xf32>
    %132 = arith.subf %115, %131 : vector<34x32xf32>
    %cst_60 = arith.constant 9.99999974E-6 : f32
    %133 = vector.broadcast %cst_60 : f32 to vector<34x1xf32>
    %134 = arith.addf %130, %133 : vector<34x1xf32>
    %135 = math.rsqrt %134 : vector<34x1xf32>
    %136 = vector.broadcast %135 : vector<34x1xf32> to vector<34x32xf32>
    %137 = arith.mulf %132, %136 : vector<34x32xf32>
    %138 = vector.broadcast %117 : vector<1x32xf32> to vector<34x32xf32>
    %139 = arith.mulf %137, %138 : vector<34x32xf32>
    %140 = vector.broadcast %119 : vector<1x32xf32> to vector<34x32xf32>
    %141 = arith.addf %139, %140 : vector<34x32xf32>
    %c0_61 = arith.constant 0 : index
    %c0_62 = arith.constant 0 : index
    %c0_63 = arith.constant 0 : index
    %142 = vector.load %arg14[%c0_61, %c0_62, %c0_63] : memref<1x32x64xbf16, #tpu.memory_space<vmem>>, vector<1x32x64xbf16>
    %143 = vector.shape_cast %142 : vector<1x32x64xbf16> to vector<32x64xbf16>
    %144 = arith.truncf %141 : vector<34x32xf32> to vector<34x32xbf16>
    %cst_64 = arith.constant dense<0.000000e+00> : vector<34x64xf32>
    %145 = tpu.matmul %144, %143, %cst_64 {dimension_numbers = #tpu.dot_dimension_numbers<[1], [0], [0], [1], [0, 0, 1, 1], [], []>} : vector<34x32xbf16>, vector<32x64xbf16>, vector<34x64xf32> -> vector<34x64xf32>
    %c0_65 = arith.constant 0 : index
    %c0_66 = arith.constant 0 : index
    %c0_67 = arith.constant 0 : index
    %146 = vector.load %arg15[%c0_65, %c0_66, %c0_67] : memref<1x1x64xf32, #tpu.memory_space<vmem>>, vector<1x1x64xf32>
    %147 = vector.shape_cast %146 : vector<1x1x64xf32> to vector<1x64xf32>
    %148 = vector.broadcast %147 : vector<1x64xf32> to vector<34x64xf32>
    %149 = arith.addf %145, %148 : vector<34x64xf32>
    %cst_68 = arith.constant 1.702000e+00 : f32
    %150 = vector.broadcast %cst_68 : f32 to vector<34x64xf32>
    %151 = arith.mulf %150, %149 : vector<34x64xf32>
    %152 = arith.negf %151 : vector<34x64xf32>
    %153 = math.exp %152 : vector<34x64xf32>
    %cst_69 = arith.constant 1.000000e+00 : f32
    %154 = vector.broadcast %cst_69 : f32 to vector<34x64xf32>
    %155 = arith.addf %154, %153 : vector<34x64xf32>
    %156 = arith.divf %154, %155 : vector<34x64xf32>
    %157 = arith.mulf %149, %156 : vector<34x64xf32>
    %c0_70 = arith.constant 0 : index
    %c0_71 = arith.constant 0 : index
    %c0_72 = arith.constant 0 : index
    %158 = vector.load %arg16[%c0_70, %c0_71, %c0_72] : memref<1x64x32xbf16, #tpu.memory_space<vmem>>, vector<1x64x32xbf16>
    %159 = vector.shape_cast %158 : vector<1x64x32xbf16> to vector<64x32xbf16>
    %160 = arith.truncf %157 : vector<34x64xf32> to vector<34x64xbf16>
    %cst_73 = arith.constant dense<0.000000e+00> : vector<34x32xf32>
    %161 = tpu.matmul %160, %159, %cst_73 {dimension_numbers = #tpu.dot_dimension_numbers<[1], [0], [0], [1], [0, 0, 1, 1], [], []>} : vector<34x64xbf16>, vector<64x32xbf16>, vector<34x32xf32> -> vector<34x32xf32>
    %162 = arith.addf %115, %161 : vector<34x32xf32>
    %c0_74 = arith.constant 0 : index
    %c0_75 = arith.constant 0 : index
    %c0_76 = arith.constant 0 : index
    %163 = vector.load %arg17[%c0_74, %c0_75, %c0_76] : memref<1x1x32xf32, #tpu.memory_space<vmem>>, vector<1x1x32xf32>
    %164 = vector.shape_cast %163 : vector<1x1x32xf32> to vector<1x32xf32>
    %165 = vector.broadcast %164 : vector<1x32xf32> to vector<34x32xf32>
    %166 = arith.addf %162, %165 : vector<34x32xf32>
    %167 = vector.extract_strided_slice %166 {offsets = [1, 0], sizes = [16, 32], strides = [1, 1]} : vector<34x32xf32> to vector<16x32xf32>
    %168 = vector.extract_strided_slice %166 {offsets = [18, 0], sizes = [16, 32], strides = [1, 1]} : vector<34x32xf32> to vector<16x32xf32>
    %169 = tpu.concatenate %167, %168 in 0 : vector<16x32xf32>, vector<16x32xf32> -> vector<32x32xf32>
    %c0_77 = arith.constant 0 : index
    %c0_78 = arith.constant 0 : index
    %170 = vector.load %arg18[%c0_77, %c0_78] : memref<32x64xbf16, #tpu.memory_space<vmem>>, vector<32x64xbf16>
    %171 = arith.truncf %169 : vector<32x32xf32> to vector<32x32xbf16>
    %cst_79 = arith.constant dense<0.000000e+00> : vector<32x64xf32>
    %172 = tpu.matmul %171, %170, %cst_79 {dimension_numbers = #tpu.dot_dimension_numbers<[1], [0], [0], [1], [0, 0, 1, 1], [], []>} : vector<32x32xbf16>, vector<32x64xbf16>, vector<32x64xf32> -> vector<32x64xf32>
    %c0_80 = arith.constant 0 : index
    %c0_81 = arith.constant 0 : index
    %173 = vector.load %arg19[%c0_80, %c0_81] : memref<1x64xf32, #tpu.memory_space<vmem>>, vector<1x64xf32>
    %174 = vector.broadcast %173 : vector<1x64xf32> to vector<32x64xf32>
    %175 = arith.addf %172, %174 : vector<32x64xf32>
    %176 = arith.mulf %175, %175 : vector<32x64xf32>
    %177 = arith.mulf %175, %176 : vector<32x64xf32>
    %cst_82 = arith.constant 4.471500e-02 : f32
    %178 = vector.broadcast %cst_82 : f32 to vector<32x64xf32>
    %179 = arith.mulf %178, %177 : vector<32x64xf32>
    %180 = arith.addf %175, %179 : vector<32x64xf32>
    %cst_83 = arith.constant 0.797884583 : f32
    %181 = vector.broadcast %cst_83 : f32 to vector<32x64xf32>
    %182 = arith.mulf %181, %180 : vector<32x64xf32>
    %183 = math.tanh %182 : vector<32x64xf32>
    %cst_84 = arith.constant 1.000000e+00 : f32
    %184 = vector.broadcast %cst_84 : f32 to vector<32x64xf32>
    %185 = arith.addf %184, %183 : vector<32x64xf32>
    %cst_85 = arith.constant 5.000000e-01 : f32
    %186 = vector.broadcast %cst_85 : f32 to vector<32x64xf32>
    %187 = arith.mulf %186, %185 : vector<32x64xf32>
    %188 = arith.mulf %175, %187 : vector<32x64xf32>
    %c0_86 = arith.constant 0 : index
    %c0_87 = arith.constant 0 : index
    %189 = vector.load %arg20[%c0_86, %c0_87] : memref<64x64xbf16, #tpu.memory_space<vmem>>, vector<64x64xbf16>
    %190 = arith.truncf %188 : vector<32x64xf32> to vector<32x64xbf16>
    %cst_88 = arith.constant dense<0.000000e+00> : vector<32x64xf32>
    %191 = tpu.matmul %190, %189, %cst_88 {dimension_numbers = #tpu.dot_dimension_numbers<[1], [0], [0], [1], [0, 0, 1, 1], [], []>} : vector<32x64xbf16>, vector<64x64xbf16>, vector<32x64xf32> -> vector<32x64xf32>
    %c0_89 = arith.constant 0 : index
    %c0_90 = arith.constant 0 : index
    %192 = vector.load %arg21[%c0_89, %c0_90] : memref<1x64xf32, #tpu.memory_space<vmem>>, vector<1x64xf32>
    %193 = vector.broadcast %192 : vector<1x64xf32> to vector<32x64xf32>
    %194 = arith.addf %191, %193 : vector<32x64xf32>
    %c0_91 = arith.constant 0 : index
    %c0_92 = arith.constant 0 : index
    %195 = vector.load %arg22[%c0_91, %c0_92] : memref<32x64xf32, #tpu.memory_space<vmem>>, vector<32x64xf32>
    tpu.vector_store %arg22[%c0_91, %c0_92], %194 {strides = array<i32>} : memref<32x64xf32, #tpu.memory_space<vmem>>, vector<32x64xf32>,
    return
  }
}

</mosaic_0001>

<llo_original>
// kernel: tpu_custom_call.1
$region0: #{tpu_custom_call.1}
  #allocation0 [shape = 'u32[]', space=smem, size = 0x4, offset = 0x4, fixed_abs, tag = 'smem constant byte address 0x4 - core index']
  #allocation1 [shape = 'u32[144,128]{1,0:T(1,128)}', space=vmem, size = 0x12000, scoped, tag = 'internal scratch']
  %s0 = inlined_call_operand.vmem [shape: bf16[34,48], index: 0, kind: input, shape index: {}]
  %s1 = inlined_call_operand.vmem [shape: f32[34,32], index: 1, kind: input, shape index: {}]
  %s2 = inlined_call_operand.vmem [shape: f32[34,34], index: 2, kind: input, shape index: {}]
  %s3 = inlined_call_operand.vmem [shape: bf16[48,32], index: 3, kind: input, shape index: {}]
  %s4 = inlined_call_operand.vmem [shape: f32[1,32], index: 4, kind: input, shape index: {}]
  %s5 = inlined_call_operand.hbm [shape: f32[1,32], index: 5, kind: input, shape index: {}]
  %s6 = inlined_call_operand.hbm [shape: f32[1,1,32], index: 6, kind: input, shape index: {}]
  %s7 = inlined_call_operand.hbm [shape: f32[1,1,32], index: 7, kind: input, shape index: {}]
  %s8 = inlined_call_operand.vmem [shape: bf16[1,32,96], index: 8, kind: input, shape index: {}]
  %s9 = inlined_call_operand.hbm [shape: f32[1,1,96], index: 9, kind: input, shape index: {}]
  %s10 = inlined_call_operand.vmem [shape: bf16[1,32,32], index: 10, kind: input, shape index: {}]
  %s11 = inlined_call_operand.hbm [shape: f32[1,1,32], index: 11, kind: input, shape index: {}]
  %s12 = inlined_call_operand.hbm [shape: f32[1,1,32], index: 12, kind: input, shape index: {}]
  %s13 = inlined_call_operand.vmem [shape: f32[1,1,32], index: 13, kind: input, shape index: {}]
  %s14 = inlined_call_operand.vmem [shape: bf16[1,32,64], index: 14, kind: input, shape index: {}]
  %s15 = inlined_call_operand.vmem [shape: f32[1,1,64], index: 15, kind: input, shape index: {}]
  %s16 = inlined_call_operand.vmem [shape: bf16[1,64,32], index: 16, kind: input, shape index: {}]
  %s17 = inlined_call_operand.vmem [shape: f32[1,1,32], index: 17, kind: input, shape index: {}]
  %s18 = inlined_call_operand.vmem [shape: bf16[32,64], index: 18, kind: input, shape index: {}]
  %s19 = inlined_call_operand.vmem [shape: f32[1,64], index: 19, kind: input, shape index: {}]
  %s20 = inlined_call_operand.vmem [shape: bf16[64,64], index: 20, kind: input, shape index: {}]
  %s21 = inlined_call_operand.vmem [shape: f32[1,64], index: 21, kind: input, shape index: {}]
  %s22 = inlined_call_operand.hbm [shape: f32[32,64], index: 22, kind: output, shape index: {}]
  %s23 = sld [smem:[#allocation0]]
  $region122: #{tpu_custom_call.1} parent=0
    _
  %s25 = ssub.s32 1, %s23
  %s26 = scalar_select 0, %s25, %s23
  $region1: #{tpu_custom_call.1} parent=0
    #allocation2 [shape = 'u8[512]{0}', space=vmem, size = 0x400, scoped, tag = 'input window, operand 5, single buffered']
    #allocation3 [shape = 's32[1]{0}', space=sflag, size = 0x4, scoped, tag = 'scoped memory for tpu_custom_call.1']
    #allocation4 [shape = 's32[1]{0}', space=sflag, size = 0x4, scoped, tag = 'scoped memory for tpu_custom_call.1']
    #allocation5 [shape = 'u8[512]{0}', space=vmem, size = 0x400, scoped, tag = 'input window, operand 6, single buffered']
    #allocation6 [shape = 's32[1]{0}', space=sflag, size = 0x4, scoped, tag = 'scoped memory for tpu_custom_call.1']
    #allocation7 [shape = 'u8[512]{0}', space=vmem, size = 0x400, scoped, tag = 'input window, operand 7, single buffered']
    #allocation8 [shape = 'u8[512]{0}', space=vmem, size = 0x400, scoped, tag = 'input window, operand 9, single buffered']
    #allocation9 [shape = 's32[1]{0}', space=sflag, size = 0x4, scoped, tag = 'scoped memory for tpu_custom_call.1']
    #allocation10 [shape = 'u8[512]{0}', space=vmem, size = 0x400, scoped, tag = 'input window, operand 11, single buffered']
    #allocation11 [shape = 'u8[512]{0}', space=vmem, size = 0x400, scoped, tag = 'input window, operand 12, single buffered']
    #allocation12 [shape = 's32[1]{0}', space=sflag, size = 0x4, scoped, tag = 'scoped memory for tpu_custom_call.1']
    #allocation13 [shape = 'u8[16384]{0}', space=vmem, size = 0x4000, scoped, tag = 'output window, operand 0, single buffered']
    %27 = vsyncpa [#allocation3], 0
    %28 = vsyncpa [#allocation6], 0
    %29 = vsyncpa [#allocation9], 0
    %30 = vsyncpa [#allocation12], 0
    %31 = vsyncpa [#allocation4], 0
    // Predicated region
    $region2: #{tpu_custom_call.1} parent=1 // pred_check
      _
    $region3: #{tpu_custom_call.1} parent=1 // pred_check_branch
      %33 = sbr.rel (0) target = $region5
    $region4: #{tpu_custom_call.1} parent=1 // pred_region
      _
    $region5: #{tpu_custom_call.1} parent=1 // pred_fallthru
      _
    // Predicated region
    $region6: #{tpu_custom_call.1} parent=1 // pred_check
      _
    $region7: #{tpu_custom_call.1} parent=1 // pred_check_branch
      %35 = sbr.rel (0) target = $region9
    $region8: #{tpu_custom_call.1} parent=1 // pred_region
      _
    $region9: #{tpu_custom_call.1} parent=1 // pred_fallthru
      _
    // Predicated region
    $region10: #{tpu_custom_call.1} parent=1 // pred_check
      _
    $region11: #{tpu_custom_call.1} parent=1 // pred_check_branch
      %37 = sbr.rel (0) target = $region13
    $region12: #{tpu_custom_call.1} parent=1 // pred_region
      _
    $region13: #{tpu_custom_call.1} parent=1 // pred_fallthru
      _
    // Predicated region
    $region14: #{tpu_custom_call.1} parent=1 // pred_check
      _
    $region15: #{tpu_custom_call.1} parent=1 // pred_check_branch
      %39 = sbr.rel (0) target = $region17
    $region16: #{tpu_custom_call.1} parent=1 // pred_region
      _
    $region17: #{tpu_custom_call.1} parent=1 // pred_fallthru
      _
    // Predicated region
    $region18: #{tpu_custom_call.1} parent=1 // pred_check
      _
    $region19: #{tpu_custom_call.1} parent=1 // pred_check_branch
      %41 = sbr.rel (0) target = $region21
    $region20: #{tpu_custom_call.1} parent=1 // pred_region
      _
    $region21: #{tpu_custom_call.1} parent=1 // pred_fallthru
      _
    // Predicated region
    $region22: #{tpu_custom_call.1} parent=1 // pred_check
      _
    $region23: #{tpu_custom_call.1} parent=1 // pred_check_branch
      %43 = sbr.rel (0) target = $region25
    $region24: #{tpu_custom_call.1} parent=1 // pred_region
      %s45 = ssub.s32 16, 16
      %46 = vsyncadd [#allocation3], %s45
      %s48 = sshll.u32 [#allocation2], 4
      %s49 = int_to_ptr.vmem [resolvable:$true] %s48
      %51 = dma.hbm_to_vmem [thread:$0]  %s5, 16, %s49, [#allocation3]
    $region25: #{tpu_custom_call.1} parent=1 // pred_fallthru
      _
    // Predicated region
    $region26: #{tpu_custom_call.1} parent=1 // pred_check
      _
    $region27: #{tpu_custom_call.1} parent=1 // pred_check_branch
      %53 = sbr.rel (0) target = $region29
    $region28: #{tpu_custom_call.1} parent=1 // pred_region
      %s55 = ssub.s32 16, 16
      %56 = vsyncadd [#allocation6], %s55
      %s58 = sshll.u32 [#allocation5], 4
      %s59 = int_to_ptr.vmem [resolvable:$true] %s58
      %61 = dma.hbm_to_vmem [thread:$0]  %s6, 16, %s59, [#allocation6]
    $region29: #{tpu_custom_call.1} parent=1 // pred_fallthru
      _
    // Predicated region
    $region30: #{tpu_custom_call.1} parent=1 // pred_check
      _
    $region31: #{tpu_custom_call.1} parent=1 // pred_check_branch
      %63 = sbr.rel (0) target = $region33
    $region32: #{tpu_custom_call.1} parent=1 // pred_region
      %s65 = ssub.s32 16, 16
      %66 = vsyncadd [#allocation6], %s65
      %s68 = sshll.u32 [#allocation7], 4
      %s69 = int_to_ptr.vmem [resolvable:$true] %s68
      %71 = dma.hbm_to_vmem [thread:$0]  %s7, 16, %s69, [#allocation6]
    $region33: #{tpu_custom_call.1} parent=1 // pred_fallthru
      _
    // Predicated region
    $region34: #{tpu_custom_call.1} parent=1 // pred_check
      _
    $region35: #{tpu_custom_call.1} parent=1 // pred_check_branch
      %73 = sbr.rel (0) target = $region37
    $region36: #{tpu_custom_call.1} parent=1 // pred_region
      _
    $region37: #{tpu_custom_call.1} parent=1 // pred_fallthru
      _
    // Predicated region
    $region38: #{tpu_custom_call.1} parent=1 // pred_check
      _
    $region39: #{tpu_custom_call.1} parent=1 // pred_check_branch
      %75 = sbr.rel (0) target = $region41
    $region40: #{tpu_custom_call.1} parent=1 // pred_region
      %s77 = ssub.s32 16, 16
      %78 = vsyncadd [#allocation9], %s77
      %s80 = sshll.u32 [#allocation8], 4
      %s81 = int_to_ptr.vmem [resolvable:$true] %s80
      %83 = dma.hbm_to_vmem [thread:$0]  %s9, 16, %s81, [#allocation9]
    $region41: #{tpu_custom_call.1} parent=1 // pred_fallthru
      _
    // Predicated region
    $region42: #{tpu_custom_call.1} parent=1 // pred_check
      _
    $region43: #{tpu_custom_call.1} parent=1 // pred_check_branch
      %85 = sbr.rel (0) target = $region45
    $region44: #{tpu_custom_call.1} parent=1 // pred_region
      _
    $region45: #{tpu_custom_call.1} parent=1 // pred_fallthru
      _
    // Predicated region
    $region46: #{tpu_custom_call.1} parent=1 // pred_check
      _
    $region47: #{tpu_custom_call.1} parent=1 // pred_check_branch
      %87 = sbr.rel (0) target = $region49
    $region48: #{tpu_custom_call.1} parent=1 // pred_region
      %s89 = ssub.s32 16, 16
      %90 = vsyncadd [#allocation9], %s89
      %s92 = sshll.u32 [#allocation10], 4
      %s93 = int_to_ptr.vmem [resolvable:$true] %s92
      %95 = dma.hbm_to_vmem [thread:$0]  %s11, 16, %s93, [#allocation9]
    $region49: #{tpu_custom_call.1} parent=1 // pred_fallthru
      _
    // Predicated region
    $region50: #{tpu_custom_call.1} parent=1 // pred_check
      _
    $region51: #{tpu_custom_call.1} parent=1 // pred_check_branch
      %97 = sbr.rel (0) target = $region53
    $region52: #{tpu_custom_call.1} parent=1 // pred_region
      %s99 = ssub.s32 16, 16
      %100 = vsyncadd [#allocation12], %s99
      %s102 = sshll.u32 [#allocation11], 4
      %s103 = int_to_ptr.vmem [resolvable:$true] %s102
      %105 = dma.hbm_to_vmem [thread:$0]  %s12, 16, %s103, [#allocation12]
    $region53: #{tpu_custom_call.1} parent=1 // pred_fallthru
      _
    // Predicated region
    $region54: #{tpu_custom_call.1} parent=1 // pred_check
      _
    $region55: #{tpu_custom_call.1} parent=1 // pred_check_branch
      %107 = sbr.rel (0) target = $region57
    $region56: #{tpu_custom_call.1} parent=1 // pred_region
      _
    $region57: #{tpu_custom_call.1} parent=1 // pred_fallthru
      _
    // Predicated region
    $region58: #{tpu_custom_call.1} parent=1 // pred_check
      _
    $region59: #{tpu_custom_call.1} parent=1 // pred_check_branch
      %109 = sbr.rel (0) target = $region61
    $region60: #{tpu_custom_call.1} parent=1 // pred_region
      _
    $region61: #{tpu_custom_call.1} parent=1 // pred_fallthru
      _
    // Predicated region
    $region62: #{tpu_custom_call.1} parent=1 // pred_check
      _
    $region63: #{tpu_custom_call.1} parent=1 // pred_check_branch
      %111 = sbr.rel (0) target = $region65
    $region64: #{tpu_custom_call.1} parent=1 // pred_region
      _
    $region65: #{tpu_custom_call.1} parent=1 // pred_fallthru
      _
    // Predicated region
    $region66: #{tpu_custom_call.1} parent=1 // pred_check
      _
    $region67: #{tpu_custom_call.1} parent=1 // pred_check_branch
      %113 = sbr.rel (0) target = $region69
    $region68: #{tpu_custom_call.1} parent=1 // pred_region
      _
    $region69: #{tpu_custom_call.1} parent=1 // pred_fallthru
      _
    // Predicated region
    $region70: #{tpu_custom_call.1} parent=1 // pred_check
      _
    $region71: #{tpu_custom_call.1} parent=1 // pred_check_branch
      %115 = sbr.rel (0) target = $region73
    $region72: #{tpu_custom_call.1} parent=1 // pred_region
      _
    $region73: #{tpu_custom_call.1} parent=1 // pred_fallthru
      _
    // Predicated region
    $region74: #{tpu_custom_call.1} parent=1 // pred_check
      _
    $region75: #{tpu_custom_call.1} parent=1 // pred_check_branch
      %117 = sbr.rel (0) target = $region77
    $region76: #{tpu_custom_call.1} parent=1 // pred_region
      _
    $region77: #{tpu_custom_call.1} parent=1 // pred_fallthru
      _
    // Predicated region
    $region78: #{tpu_custom_call.1} parent=1 // pred_check
      _
    $region79: #{tpu_custom_call.1} parent=1 // pred_check_branch
      %119 = sbr.rel (0) target = $region81
    $region80: #{tpu_custom_call.1} parent=1 // pred_region
      _
    $region81: #{tpu_custom_call.1} parent=1 // pred_fallthru
      _
    // Predicated region
    $region82: #{tpu_custom_call.1} parent=1 // pred_check
      _
    $region83: #{tpu_custom_call.1} parent=1 // pred_check_branch
      %121 = sbr.rel (0) target = $region85
    $region84: #{tpu_custom_call.1} parent=1 // pred_region
      _
    $region85: #{tpu_custom_call.1} parent=1 // pred_fallthru
      _
    // Predicated region
    $region86: #{tpu_custom_call.1} parent=1 // pred_check
      _
    $region87: #{tpu_custom_call.1} parent=1 // pred_check_branch
      %123 = sbr.rel (0) target = $region89
    $region88: #{tpu_custom_call.1} parent=1 // pred_region
      _
    $region89: #{tpu_custom_call.1} parent=1 // pred_fallthru
      _
    // Predicated region
    $region90: #{tpu_custom_call.1} parent=1 // pred_check
      _
    $region91: #{tpu_custom_call.1} parent=1 // pred_check_branch
      %125 = sbr.rel (0) target = $region93
    $region92: #{tpu_custom_call.1} parent=1 // pred_region
      %126 = dma.done [#allocation3], 16
    $region93: #{tpu_custom_call.1} parent=1 // pred_fallthru
      _
    // Predicated region
    $region94: #{tpu_custom_call.1} parent=1 // pred_check
      _
    $region95: #{tpu_custom_call.1} parent=1 // pred_check_branch
      %128 = sbr.rel (0) target = $region97
    $region96: #{tpu_custom_call.1} parent=1 // pred_region
      %129 = dma.done [#allocation6], 16
    $region97: #{tpu_custom_call.1} parent=1 // pred_fallthru
      _
    // Predicated region
    $region98: #{tpu_custom_call.1} parent=1 // pred_check
      _
    $region99: #{tpu_custom_call.1} parent=1 // pred_check_branch
      %131 = sbr.rel (0) target = $region101
    $region100: #{tpu_custom_call.1} parent=1 // pred_region
      %132 = dma.done [#allocation6], 16
    $region101: #{tpu_custom_call.1} parent=1 // pred_fallthru
      _
    // Predicated region
    $region102: #{tpu_custom_call.1} parent=1 // pred_check
      _
    $region103: #{tpu_custom_call.1} parent=1 // pred_check_branch
      %134 = sbr.rel (0) target = $region105
    $region104: #{tpu_custom_call.1} parent=1 // pred_region
      %135 = dma.done [#allocation9], 16
    $region105: #{tpu_custom_call.1} parent=1 // pred_fallthru
      _
    // Predicated region
    $region106: #{tpu_custom_call.1} parent=1 // pred_check
      _
    $region107: #{tpu_custom_call.1} parent=1 // pred_check_branch
      %137 = sbr.rel (0) target = $region109
    $region108: #{tpu_custom_call.1} parent=1 // pred_region
      %138 = dma.done [#allocation9], 16
    $region109: #{tpu_custom_call.1} parent=1 // pred_fallthru
      _
    // Predicated region
    $region110: #{tpu_custom_call.1} parent=1 // pred_check
      _
    $region111: #{tpu_custom_call.1} parent=1 // pred_check_branch
      %140 = sbr.rel (0) target = $region113
    $region112: #{tpu_custom_call.1} parent=1 // pred_region
      %141 = dma.done [#allocation12], 16
    $region113: #{tpu_custom_call.1} parent=1 // pred_fallthru
      _
    %v143 = vld [vmem:[%s2] sm:$0xff]
    %v144 = vld [vmem:[%s2 + $0x8] sm:$0xff]
    %v145 = vld [vmem:[%s2 + $0x10] sm:$0xff]
    %v146 = vld [vmem:[%s2 + $0x18] sm:$0xff]
    %v147 = vld [vmem:[%s2 + $0x20] sm:$0x3]
    %v148 = vld [vmem:[%s1] sm:$0xff]
    %v149 = vld [vmem:[%s1 + $0x8] sm:$0xff]
    %v150 = vld [vmem:[%s1 + $0x10] sm:$0xff]
    %v151 = vld [vmem:[%s1 + $0x18] sm:$0xff]
    %v152 = vld [vmem:[%s1 + $0x20] sm:$0x3]
    %v153 = vld [vmem:[%s0] sm:$0xf]
    %v154 = vld [vmem:[%s0 + $0x4] sm:$0xf]
    %v155 = vld [vmem:[%s0 + $0x8] sm:$0xf]
    %v156 = vld [vmem:[%s0 + $0xc] sm:$0xf]
    %v157 = vld [vmem:[%s0 + $0x10] sm:$0x1]
    %v158 = vld [vmem:[%s3] sm:$0xf]
    %v159 = vld [vmem:[%s3 + $0x4] sm:$0xf]
    %v160 = vld [vmem:[%s3 + $0x8] sm:$0xf]
    %v161 = vld [vmem:[%s3 + $0xc] sm:$0xf]
    %v162 = vld [vmem:[%s3 + $0x10] sm:$0xf]
    %v163 = vld [vmem:[%s3 + $0x14] sm:$0xf]
    %v169 = vunpack.c.l.b16 %v153
    %v170 = vunpack.c.l.b16 %v154
    %v171 = vunpack.c.l.b16 %v155
    %v172 = vunpack.c.l.b16 %v156
    %v173 = vunpack.c.l.b16 %v157
    %v174 = vpack.c.b16 %v170, %v169
    %v175 = vpack.c.b16 %v172, %v171
    %v176 = vpack.c.b16 %v173, %v173
    %v183 = vunpack.c.l.b16 %v158
    %v184 = vunpack.c.l.b16 %v159
    %v185 = vunpack.c.l.b16 %v160
    %v186 = vunpack.c.l.b16 %v161
    %v187 = vunpack.c.l.b16 %v162
    %v188 = vunpack.c.l.b16 %v163
    %v189 = vpack.c.b16 %v184, %v183
    %v190 = vpack.c.b16 %v186, %v185
    %v191 = vpack.c.b16 %v188, %v187
    %vm195 = vcmask 392192
    %v197 = vsel %vm195, %v174, 0
    %v200 = vsel %vm195, %v175, 0
    %v203 = vsel %vm195, %v176, 0
    %205 = vmatprep.subr.bf16.mxu0 0
    %206 = vmatpush1.bf16.msra.mxu0 %v189
    %207 = vmatprep.subr.bf16.mxu0 0
    %208 = vmatpush1.bf16.msra.mxu0 %v190
    %209 = vmatprep.subr.bf16.mxu0 0
    %210 = vmatpush1.bf16.msra.mxu0 %v191
    %211 = vmatprep.subr.bf16.mxu0 0
    %212 = vmatpush1.bf16.msra.mxu0 0
    %213 = vmatprep.subr.bf16.mxu0 0
    %214 = vmatpush1.bf16.msra.mxu0 0
    %215 = vmatprep.subr.bf16.mxu0 0
    %216 = vmatpush1.bf16.msra.mxu0 0
    %217 = vmatprep.subr.bf16.mxu0 0
    %218 = vmatpush1.bf16.msra.mxu0 0
    %219 = vmatprep.subr.bf16.mxu0 0
    %220 = vmatpush1.bf16.msra.mxu0 0
    %221 = vmatprep.subr.bf16.mxu0 0
    %222 = vmatpush1.bf16.msra.mxu0 0
    %223 = vmatprep.subr.bf16.mxu0 0
    %224 = vmatpush1.bf16.msra.mxu0 0
    %225 = vmatprep.subr.bf16.mxu0 0
    %226 = vmatpush1.bf16.msra.mxu0 0
    %227 = vmatprep.subr.bf16.mxu0 0
    %228 = vmatpush1.bf16.msra.mxu0 0
    %229 = vmatprep.subr.bf16.mxu0 0
    %230 = vmatpush1.bf16.msra.mxu0 0
    %231 = vmatprep.subr.bf16.mxu0 0
    %232 = vmatpush1.bf16.msra.mxu0 0
    %233 = vmatprep.subr.bf16.mxu0 0
    %234 = vmatpush1.bf16.msra.mxu0 0
    %235 = vmatprep.subr.bf16.mxu0 0
    %236 = vmatpush1.bf16.msra.mxu0 0
    %237 = vmatprep.mubr.bf16.mxu0 0
    %238 = vmatmul.mubr.bf16.gmra.mrb[0].mxu0 %v197
    %v239 = vpop.f32.mrb[0].mxu0
    %v240 = vadd.f32 0.0, %v239
    %v241 = vpop.f32.mrb[0].mxu0
    %v242 = vpop.f32.mrb[0].mxu0
    %v243 = vadd.f32 0.0, %v242
    %v244 = vpop.f32.mrb[0].mxu0
    %245 = vmatprep.mubr.bf16.mxu0 0
    %246 = vmatmul.mubr.bf16.gmra.mrb[0].mxu0 %v200
    %v247 = vpop.f32.mrb[0].mxu0
    %v248 = vadd.f32 0.0, %v247
    %v249 = vpop.f32.mrb[0].mxu0
    %v250 = vpop.f32.mrb[0].mxu0
    %v251 = vadd.f32 0.0, %v250
    %v252 = vpop.f32.mrb[0].mxu0
    %253 = vmatprep.mubr.bf16.mxu0 0
    %254 = vmatmul.mubr.bf16.gmra.mrb[0].mxu0 %v203
    %v255 = vpop.f32.mrb[0].mxu0
    %v256 = vadd.f32 0.0, %v255
    %v257 = vpop.f32.mrb[0].mxu0
    %v258 = vpop.f32.mrb[0].mxu0
    %v259 = vpop.f32.mrb[0].mxu0
    %260 = vdwg.mxu0
    %v261 = vadd.f32 %v148, %v240
    %v262 = vadd.f32 %v149, %v243
    %v263 = vadd.f32 %v150, %v248
    %v264 = vadd.f32 %v151, %v251
    %v265 = vadd.f32 %v152, %v256
    %v266 = vld [vmem:[%s4] sm:$0x1]
    %v267 = vld [vmem:[#allocation2] sm:$0x1]
    %vm268 = vcmask 261120
    %v269 = vsel %vm268, %v261, 0.0
    %270 = vadd.xlane.f32.xlu0 %v269
    %v271 = vpop.xlane.xlu0 %270
    %v272 = vsel %vm268, %v262, 0.0
    %273 = vadd.xlane.f32.xlu0 %v272
    %v274 = vpop.xlane.xlu0 %273
    %v275 = vsel %vm268, %v263, 0.0
    %276 = vadd.xlane.f32.xlu0 %v275
    %v277 = vpop.xlane.xlu0 %276
    %v278 = vsel %vm268, %v264, 0.0
    %279 = vadd.xlane.f32.xlu0 %v278
    %v280 = vpop.xlane.xlu0 %279
    %vm281 = vcmask 254976
    %v282 = vsel %vm281, %v265, 0.0
    %283 = vadd.xlane.f32.xlu0 %v282
    %v284 = vpop.xlane.xlu0 %283
    %v285 = vrcp.pop 32.0
    %v286 = vmul.f32 %v271, %v285
    %v287 = vmul.f32 %v274, %v285
    %v288 = vmul.f32 %v277, %v285
    %v289 = vmul.f32 %v280, %v285
    %v290 = vmul.f32 %v284, %v285
    %v291 = vsub.f32 %v261, %v286
    %v292 = vsub.f32 %v262, %v287
    %v293 = vsub.f32 %v263, %v288
    %v294 = vsub.f32 %v264, %v289
    %v295 = vsub.f32 %v265, %v290
    %v296 = vmul.f32 %v291, %v291
    %v297 = vmul.f32 %v292, %v292
    %v298 = vmul.f32 %v293, %v293
    %v299 = vmul.f32 %v294, %v294
    %v300 = vmul.f32 %v295, %v295
    %v301 = vsel %vm268, %v296, 0.0
    %302 = vadd.xlane.f32.xlu0 %v301
    %v303 = vpop.xlane.xlu0 %302
    %v304 = vsel %vm268, %v297, 0.0
    %305 = vadd.xlane.f32.xlu0 %v304
    %v306 = vpop.xlane.xlu0 %305
    %v307 = vsel %vm268, %v298, 0.0
    %308 = vadd.xlane.f32.xlu0 %v307
    %v309 = vpop.xlane.xlu0 %308
    %v310 = vsel %vm268, %v299, 0.0
    %311 = vadd.xlane.f32.xlu0 %v310
    %v312 = vpop.xlane.xlu0 %311
    %v313 = vsel %vm281, %v300, 0.0
    %314 = vadd.xlane.f32.xlu0 %v313
    %v315 = vpop.xlane.xlu0 %314
    %v316 = vmul.f32 %v303, %v285
    %v317 = vmul.f32 %v306, %v285
    %v318 = vmul.f32 %v309, %v285
    %v319 = vmul.f32 %v312, %v285
    %v320 = vmul.f32 %v315, %v285
    %v321 = vadd.f32 %v316, 1e-05
    %v322 = vadd.f32 %v317, 1e-05
    %v323 = vadd.f32 %v318, 1e-05
    %v324 = vadd.f32 %v319, 1e-05
    %v325 = vadd.f32 %v320, 1e-05
    %v326 = vrsqrt.pop %v321
    %v327 = vrsqrt.pop %v322
    %v328 = vrsqrt.pop %v323
    %v329 = vrsqrt.pop %v324
    %v330 = vrsqrt.pop %v325
    %v331 = vmul.f32 %v291, %v326
    %v332 = vmul.f32 %v292, %v327
    %v333 = vmul.f32 %v293, %v328
    %v334 = vmul.f32 %v294, %v329
    %v335 = vmul.f32 %v295, %v330
    %v337 = vlaneseq
    %v338 = vshrl.u32 %v337, 7
    %v339 = vsub.s32 0, %v338
    %v340 = vrot.slane %v266, %v339
    %v342 = vmul.f32 %v331, %v340
    %v343 = vmul.f32 %v332, %v340
    %v344 = vmul.f32 %v333, %v340
    %v345 = vmul.f32 %v334, %v340
    %v346 = vmul.f32 %v335, %v340
    %v348 = vlaneseq
    %v349 = vshrl.u32 %v348, 7
    %v350 = vsub.s32 0, %v349
    %v351 = vrot.slane %v267, %v350
    %v353 = vadd.f32 %v342, %v351
    %v354 = vadd.f32 %v343, %v351
    %v355 = vadd.f32 %v344, %v351
    %v356 = vadd.f32 %v345, %v351
    %v357 = vadd.f32 %v346, %v351
    %v358 = vld [vmem:[#allocation5] sm:$0x1]
    %v359 = vld [vmem:[#allocation7] sm:$0x1]
    %v360 = vsel %vm268, %v353, 0.0
    %361 = vadd.xlane.f32.xlu0 %v360
    %v362 = vpop.xlane.xlu0 %361
    %v363 = vsel %vm268, %v354, 0.0
    %364 = vadd.xlane.f32.xlu0 %v363
    %v365 = vpop.xlane.xlu0 %364
    %v366 = vsel %vm268, %v355, 0.0
    %367 = vadd.xlane.f32.xlu0 %v366
    %v368 = vpop.xlane.xlu0 %367
    %v369 = vsel %vm268, %v356, 0.0
    %370 = vadd.xlane.f32.xlu0 %v369
    %v371 = vpop.xlane.xlu0 %370
    %v372 = vsel %vm281, %v357, 0.0
    %373 = vadd.xlane.f32.xlu0 %v372
    %v374 = vpop.xlane.xlu0 %373
    %v375 = vmul.f32 %v362, %v285
    %v376 = vmul.f32 %v365, %v285
    %v377 = vmul.f32 %v368, %v285
    %v378 = vmul.f32 %v371, %v285
    %v379 = vmul.f32 %v374, %v285
    %v380 = vsub.f32 %v353, %v375
    %v381 = vsub.f32 %v354, %v376
    %v382 = vsub.f32 %v355, %v377
    %v383 = vsub.f32 %v356, %v378
    %v384 = vsub.f32 %v357, %v379
    %v385 = vmul.f32 %v380, %v380
    %v386 = vmul.f32 %v381, %v381
    %v387 = vmul.f32 %v382, %v382
    %v388 = vmul.f32 %v383, %v383
    %v389 = vmul.f32 %v384, %v384
    %v390 = vsel %vm268, %v385, 0.0
    %391 = vadd.xlane.f32.xlu0 %v390
    %v392 = vpop.xlane.xlu0 %391
    %v393 = vsel %vm268, %v386, 0.0
    %394 = vadd.xlane.f32.xlu0 %v393
    %v395 = vpop.xlane.xlu0 %394
    %v396 = vsel %vm268, %v387, 0.0
    %397 = vadd.xlane.f32.xlu0 %v396
    %v398 = vpop.xlane.xlu0 %397
    %v399 = vsel %vm268, %v388, 0.0
    %400 = vadd.xlane.f32.xlu0 %v399
    %v401 = vpop.xlane.xlu0 %400
    %v402 = vsel %vm281, %v389, 0.0
    %403 = vadd.xlane.f32.xlu0 %v402
    %v404 = vpop.xlane.xlu0 %403
    %v405 = vmul.f32 %v392, %v285
    %v406 = vmul.f32 %v395, %v285
    %v407 = vmul.f32 %v398, %v285
    %v408 = vmul.f32 %v401, %v285
    %v409 = vmul.f32 %v404, %v285
    %v410 = vadd.f32 %v405, 1e-05
    %v411 = vadd.f32 %v406, 1e-05
    %v412 = vadd.f32 %v407, 1e-05
    %v413 = vadd.f32 %v408, 1e-05
    %v414 = vadd.f32 %v409, 1e-05
    %v415 = vrsqrt.pop %v410
    %v416 = vrsqrt.pop %v411
    %v417 = vrsqrt.pop %v412
    %v418 = vrsqrt.pop %v413
    %v419 = vrsqrt.pop %v414
    %v420 = vmul.f32 %v380, %v415
    %v421 = vmul.f32 %v381, %v416
    %v422 = vmul.f32 %v382, %v417
    %v423 = vmul.f32 %v383, %v418
    %v424 = vmul.f32 %v384, %v419
    %v426 = vlaneseq
    %v427 = vshrl.u32 %v426, 7
    %v428 = vsub.s32 0, %v427
    %v429 = vrot.slane %v358, %v428
    %v431 = vmul.f32 %v420, %v429
    %v432 = vmul.f32 %v421, %v429
    %v433 = vmul.f32 %v422, %v429
    %v434 = vmul.f32 %v423, %v429
    %v435 = vmul.f32 %v424, %v429
    %v437 = vlaneseq
    %v438 = vshrl.u32 %v437, 7
    %v439 = vsub.s32 0, %v438
    %v440 = vrot.slane %v359, %v439
    %v442 = vadd.f32 %v431, %v440
    %v443 = vadd.f32 %v432, %v440
    %v444 = vadd.f32 %v433, %v440
    %v445 = vadd.f32 %v434, %v440
    %v446 = vadd.f32 %v435, %v440
    %v447 = vld [vmem:[%s8] sm:$0xf]
    %v448 = vld [vmem:[%s8 + $0x4] sm:$0xf]
    %v449 = vld [vmem:[%s8 + $0x8] sm:$0xf]
    %v450 = vld [vmem:[%s8 + $0xc] sm:$0xf]
    %v451 = vpack.c.bf16 %v443, %v442
    %v452 = vpack.c.bf16 %v445, %v444
    %v453 = vpack.c.bf16 %v446, %v446
    %v454 = vld [vmem:[#allocation8] sm:$0x1]
    %v456 = vlaneseq
    %v457 = vshrl.u32 %v456, 7
    %v458 = vsub.s32 0, %v457
    %v459 = vrot.slane %v454, %v458
    %v465 = vunpack.c.l.b16 %v447
    %v466 = vunpack.c.l.b16 %v448
    %v467 = vunpack.c.l.b16 %v449
    %v468 = vunpack.c.l.b16 %v450
    %v469 = vpack.c.b16 %v466, %v465
    %v470 = vpack.c.b16 %v468, %v467
    %v474 = vsel %vm268, %v451, 0
    %v477 = vsel %vm268, %v452, 0
    %v480 = vsel %vm268, %v453, 0
    %482 = vmatprep.subr.bf16.mxu0 0
    %483 = vmatpush1.bf16.msra.mxu0 %v469
    %484 = vmatprep.subr.bf16.mxu0 0
    %485 = vmatpush1.bf16.msra.mxu0 %v470
    %486 = vmatprep.subr.bf16.mxu0 0
    %487 = vmatpush1.bf16.msra.mxu0 0
    %488 = vmatprep.subr.bf16.mxu0 0
    %489 = vmatpush1.bf16.msra.mxu0 0
    %490 = vmatprep.subr.bf16.mxu0 0
    %491 = vmatpush1.bf16.msra.mxu0 0
    %492 = vmatprep.subr.bf16.mxu0 0
    %493 = vmatpush1.bf16.msra.mxu0 0
    %494 = vmatprep.subr.bf16.mxu0 0
    %495 = vmatpush1.bf16.msra.mxu0 0
    %496 = vmatprep.subr.bf16.mxu0 0
    %497 = vmatpush1.bf16.msra.mxu0 0
    %498 = vmatprep.subr.bf16.mxu0 0
    %499 = vmatpush1.bf16.msra.mxu0 0
    %500 = vmatprep.subr.bf16.mxu0 0
    %501 = vmatpush1.bf16.msra.mxu0 0
    %502 = vmatprep.subr.bf16.mxu0 0
    %503 = vmatpush1.bf16.msra.mxu0 0
    %504 = vmatprep.subr.bf16.mxu0 0
    %505 = vmatpush1.bf16.msra.mxu0 0
    %506 = vmatprep.subr.bf16.mxu0 0
    %507 = vmatpush1.bf16.msra.mxu0 0
    %508 = vmatprep.subr.bf16.mxu0 0
    %509 = vmatpush1.bf16.msra.mxu0 0
    %510 = vmatprep.subr.bf16.mxu0 0
    %511 = vmatpush1.bf16.msra.mxu0 0
    %512 = vmatprep.subr.bf16.mxu0 0
    %513 = vmatpush1.bf16.msra.mxu0 0
    %514 = vmatprep.mubr.bf16.mxu0 0
    %515 = vmatmul.mubr.bf16.gmra.mrb[0].mxu0 %v474
    %v516 = vpop.f32.mrb[0].mxu0
    %v517 = vadd.f32 %v459, %v516
    %v518 = vpop.f32.mrb[0].mxu0
    %v519 = vpop.f32.mrb[0].mxu0
    %v520 = vadd.f32 %v459, %v519
    %v521 = vpop.f32.mrb[0].mxu0
    %522 = vmatprep.mubr.bf16.mxu0 0
    %523 = vmatmul.mubr.bf16.gmra.mrb[0].mxu0 %v477
    %v524 = vpop.f32.mrb[0].mxu0
    %v525 = vadd.f32 %v459, %v524
    %v526 = vpop.f32.mrb[0].mxu0
    %v527 = vpop.f32.mrb[0].mxu0
    %v528 = vadd.f32 %v459, %v527
    %v529 = vpop.f32.mrb[0].mxu0
    %530 = vmatprep.mubr.bf16.mxu0 0
    %531 = vmatmul.mubr.bf16.gmra.mrb[0].mxu0 %v480
    %v532 = vpop.f32.mrb[0].mxu0
    %v533 = vadd.f32 %v459, %v532
    %v534 = vpop.f32.mrb[0].mxu0
    %v535 = vpop.f32.mrb[0].mxu0
    %v536 = vpop.f32.mrb[0].mxu0
    %537 = vdwg.mxu0
    %v538 = vmul.f32 %v517, 0.25
    %v539 = vmul.f32 %v520, 0.25
    %v540 = vmul.f32 %v525, 0.25
    %v541 = vmul.f32 %v528, 0.25
    %v542 = vmul.f32 %v533, 0.25
    %v543 = vpack.c.bf16 %v539, %v538
    %v544 = vpack.c.bf16 %v541, %v540
    %v545 = vpack.c.bf16 %v542, %v542
    %v546 = vpack.c.bf16 %v520, %v517
    %v547 = vpack.c.bf16 %v528, %v525
    %v548 = vpack.c.bf16 %v533, %v533
    %552 = vrot.lane.b32.xlu0 %v546, 96
    %v553 = vpop.permute.xlu0 %552
    %554 = vrot.lane.b32.xlu0 %v547, 96
    %v555 = vpop.permute.xlu0 %554
    %556 = vrot.lane.b32.xlu0 %v548, 96
    %v557 = vpop.permute.xlu0 %556
    %vm558 = vcmask 130048
    %v560 = vsel %vm558, %v543, 0
    %v563 = vsel %vm558, %v544, 0
    %v566 = vsel %vm558, %v545, 0
    %v569 = vsel %vm558, %v553, 0
    %v572 = vsel %vm558, %v555, 0
    %v575 = vsel %vm558, %v557, 0
    %577 = vmatprep.subr.bf16.mxu0 0
    %578 = vmatpush1.bf16.xpose.msra.mxu0 %v569
    %579 = vmatprep.subr.bf16.mxu0 0
    %580 = vmatpush1.bf16.xpose.msra.mxu0 %v572
    %581 = vmatprep.subr.bf16.mxu0 0
    %582 = vmatpush1.bf16.xpose.msra.mxu0 %v575
    %583 = vmatprep.subr.bf16.mxu0 0
    %584 = vmatpush1.bf16.xpose.msra.mxu0 0
    %585 = vmatprep.subr.bf16.mxu0 0
    %586 = vmatpush1.bf16.xpose.msra.mxu0 0
    %587 = vmatprep.subr.bf16.mxu0 0
    %588 = vmatpush1.bf16.xpose.msra.mxu0 0
    %589 = vmatprep.subr.bf16.mxu0 0
    %590 = vmatpush1.bf16.xpose.msra.mxu0 0
    %591 = vmatprep.subr.bf16.mxu0 0
    %592 = vmatpush1.bf16.xpose.msra.mxu0 0
    %593 = vmatprep.subr.bf16.mxu0 0
    %594 = vmatpush1.bf16.xpose.msra.mxu0 0
    %595 = vmatprep.subr.bf16.mxu0 0
    %596 = vmatpush1.bf16.xpose.msra.mxu0 0
    %597 = vmatprep.subr.bf16.mxu0 0
    %598 = vmatpush1.bf16.xpose.msra.mxu0 0
    %599 = vmatprep.subr.bf16.mxu0 0
    %600 = vmatpush1.bf16.xpose.msra.mxu0 0
    %601 = vmatprep.subr.bf16.mxu0 0
    %602 = vmatpush1.bf16.xpose.msra.mxu0 0
    %603 = vmatprep.subr.bf16.mxu0 0
    %604 = vmatpush1.bf16.xpose.msra.mxu0 0
    %605 = vmatprep.subr.bf16.mxu0 0
    %606 = vmatpush1.bf16.xpose.msra.mxu0 0
    %607 = vmatprep.subr.bf16.mxu0 0
    %608 = vmatpush1.bf16.xpose.msra.mxu0 0
    %609 = vmatprep.mubr.bf16.mxu0 0
    %610 = vmatmul.mubr.bf16.gmra.mrb[0].mxu0 %v560
    %v611 = vpop.f32.mrb[0].mxu0
    %v612 = vadd.f32 %v143, %v611
    %v613 = vpop.f32.mrb[0].mxu0
    %v614 = vpop.f32.mrb[0].mxu0
    %v615 = vadd.f32 %v144, %v614
    %v616 = vpop.f32.mrb[0].mxu0
    %617 = vmatprep.mubr.bf16.mxu0 0
    %618 = vmatmul.mubr.bf16.gmra.mrb[0].mxu0 %v563
    %v619 = vpop.f32.mrb[0].mxu0
    %v620 = vadd.f32 %v145, %v619
    %v621 = vpop.f32.mrb[0].mxu0
    %v622 = vpop.f32.mrb[0].mxu0
    %v623 = vadd.f32 %v146, %v622
    %v624 = vpop.f32.mrb[0].mxu0
    %625 = vmatprep.mubr.bf16.mxu0 0
    %626 = vmatmul.mubr.bf16.gmra.mrb[0].mxu0 %v566
    %v627 = vpop.f32.mrb[0].mxu0
    %v628 = vadd.f32 %v147, %v627
    %v629 = vpop.f32.mrb[0].mxu0
    %v630 = vpop.f32.mrb[0].mxu0
    %v631 = vpop.f32.mrb[0].mxu0
    %632 = vdwg.mxu0
    %vm633 = vcmask 277504
    %v634 = vsel %vm633, %v612, -inf
    %635 = vmax.xlane.f32.xlu0 %v634
    %v636 = vpop.xlane.xlu0 %635
    %v637 = vsel %vm633, %v615, -inf
    %638 = vmax.xlane.f32.xlu0 %v637
    %v639 = vpop.xlane.xlu0 %638
    %v640 = vsel %vm633, %v620, -inf
    %641 = vmax.xlane.f32.xlu0 %v640
    %v642 = vpop.xlane.xlu0 %641
    %v643 = vsel %vm633, %v623, -inf
    %644 = vmax.xlane.f32.xlu0 %v643
    %v645 = vpop.xlane.xlu0 %644
    %vm646 = vcmask 271360
    %v647 = vsel %vm646, %v628, -inf
    %648 = vmax.xlane.f32.xlu0 %v647
    %v649 = vpop.xlane.xlu0 %648
    %v650 = vsub.f32 %v612, %v636
    %v651 = vsub.f32 %v615, %v639
    %v652 = vsub.f32 %v620, %v642
    %v653 = vsub.f32 %v623, %v645
    %v654 = vsub.f32 %v628, %v649
    %v655 = vmul.f32 %v650, 1.442695
    %v656 = vpow.pop %v655
    %v657 = vmul.f32 %v651, 1.442695
    %v658 = vpow.pop %v657
    %v659 = vmul.f32 %v652, 1.442695
    %v660 = vpow.pop %v659
    %v661 = vmul.f32 %v653, 1.442695
    %v662 = vpow.pop %v661
    %v663 = vmul.f32 %v654, 1.442695
    %v664 = vpow.pop %v663
    %v665 = vsel %vm633, %v656, 0.0
    %666 = vadd.xlane.f32.xlu0 %v665
    %v667 = vpop.xlane.xlu0 %666
    %v668 = vsel %vm633, %v658, 0.0
    %669 = vadd.xlane.f32.xlu0 %v668
    %v670 = vpop.xlane.xlu0 %669
    %v671 = vsel %vm633, %v660, 0.0
    %672 = vadd.xlane.f32.xlu0 %v671
    %v673 = vpop.xlane.xlu0 %672
    %v674 = vsel %vm633, %v662, 0.0
    %675 = vadd.xlane.f32.xlu0 %v674
    %v676 = vpop.xlane.xlu0 %675
    %v677 = vsel %vm646, %v664, 0.0
    %678 = vadd.xlane.f32.xlu0 %v677
    %v679 = vpop.xlane.xlu0 %678
    %v680 = vrcp.pop %v667
    %v681 = vrcp.pop %v670
    %v682 = vrcp.pop %v673
    %v683 = vrcp.pop %v676
    %v684 = vrcp.pop %v679
    %v685 = vmul.f32 %v656, %v680
    %v686 = vmul.f32 %v658, %v681
    %v687 = vmul.f32 %v660, %v682
    %v688 = vmul.f32 %v662, %v683
    %v689 = vmul.f32 %v664, %v684
    %v690 = vpack.c.bf16 %v686, %v685
    %v691 = vpack.c.bf16 %v688, %v687
    %v692 = vpack.c.bf16 %v689, %v689
    %693 = vrot.lane.b32.xlu0 %v546, 64
    %v694 = vpop.permute.xlu0 %693
    %695 = vrot.lane.b32.xlu0 %v547, 64
    %v696 = vpop.permute.xlu0 %695
    %697 = vrot.lane.b32.xlu0 %v548, 64
    %v698 = vpop.permute.xlu0 %697
    %v702 = vsel %vm633, %v690, 0
    %v705 = vsel %vm633, %v691, 0
    %v708 = vsel %vm633, %v692, 0
    %vm710 = vcmask 1040384
    %v712 = vsel %vm710, %v698, 0
    %714 = vmatprep.subr.bf16.mxu0 0
    %715 = vmatpush1.bf16.msra.mxu0 %v694
    %716 = vmatprep.subr.bf16.mxu0 0
    %717 = vmatpush1.bf16.msra.mxu0 %v696
    %718 = vmatprep.subr.bf16.mxu0 0
    %719 = vmatpush1.bf16.msra.mxu0 %v712
    %720 = vmatprep.subr.bf16.mxu0 0
    %721 = vmatpush1.bf16.msra.mxu0 0
    %722 = vmatprep.subr.bf16.mxu0 0
    %723 = vmatpush1.bf16.msra.mxu0 0
    %724 = vmatprep.subr.bf16.mxu0 0
    %725 = vmatpush1.bf16.msra.mxu0 0
    %726 = vmatprep.subr.bf16.mxu0 0
    %727 = vmatpush1.bf16.msra.mxu0 0
    %728 = vmatprep.subr.bf16.mxu0 0
    %729 = vmatpush1.bf16.msra.mxu0 0
    %730 = vmatprep.subr.bf16.mxu0 0
    %731 = vmatpush1.bf16.msra.mxu0 0
    %732 = vmatprep.subr.bf16.mxu0 0
    %733 = vmatpush1.bf16.msra.mxu0 0
    %734 = vmatprep.subr.bf16.mxu0 0
    %735 = vmatpush1.bf16.msra.mxu0 0
    %736 = vmatprep.subr.bf16.mxu0 0
    %737 = vmatpush1.bf16.msra.mxu0 0
    %738 = vmatprep.subr.bf16.mxu0 0
    %739 = vmatpush1.bf16.msra.mxu0 0
    %740 = vmatprep.subr.bf16.mxu0 0
    %741 = vmatpush1.bf16.msra.mxu0 0
    %742 = vmatprep.subr.bf16.mxu0 0
    %743 = vmatpush1.bf16.msra.mxu0 0
    %744 = vmatprep.subr.bf16.mxu0 0
    %745 = vmatpush1.bf16.msra.mxu0 0
    %746 = vmatprep.mubr.bf16.mxu0 0
    %747 = vmatmul.mubr.bf16.gmra.mrb[0].mxu0 %v702
    %v748 = vpop.f32.mrb[0].mxu0
    %v749 = vadd.f32 0.0, %v748
    %v750 = vpop.f32.mrb[0].mxu0
    %v751 = vpop.f32.mrb[0].mxu0
    %v752 = vadd.f32 0.0, %v751
    %v753 = vpop.f32.mrb[0].mxu0
    %754 = vmatprep.mubr.bf16.mxu0 0
    %755 = vmatmul.mubr.bf16.gmra.mrb[0].mxu0 %v705
    %v756 = vpop.f32.mrb[0].mxu0
    %v757 = vadd.f32 0.0, %v756
    %v758 = vpop.f32.mrb[0].mxu0
    %v759 = vpop.f32.mrb[0].mxu0
    %v760 = vadd.f32 0.0, %v759
    %v761 = vpop.f32.mrb[0].mxu0
    %762 = vmatprep.mubr.bf16.mxu0 0
    %763 = vmatmul.mubr.bf16.gmra.mrb[0].mxu0 %v708
    %v764 = vpop.f32.mrb[0].mxu0
    %v765 = vadd.f32 0.0, %v764
    %v766 = vpop.f32.mrb[0].mxu0
    %v767 = vpop.f32.mrb[0].mxu0
    %v768 = vpop.f32.mrb[0].mxu0
    %769 = vdwg.mxu0
    %773 = vrot.lane.b32.xlu0 %v543, 112
    %v774 = vpop.permute.xlu0 %773
    %775 = vrot.lane.b32.xlu0 %v544, 112
    %v776 = vpop.permute.xlu0 %775
    %777 = vrot.lane.b32.xlu0 %v545, 112
    %v778 = vpop.permute.xlu0 %777
    %779 = vrot.lane.b32.xlu0 %v546, 80
    %v780 = vpop.permute.xlu0 %779
    %781 = vrot.lane.b32.xlu0 %v547, 80
    %v782 = vpop.permute.xlu0 %781
    %783 = vrot.lane.b32.xlu0 %v548, 80
    %v784 = vpop.permute.xlu0 %783
    %v786 = vsel %vm558, %v774, 0
    %v789 = vsel %vm558, %v776, 0
    %v792 = vsel %vm558, %v778, 0
    %v795 = vsel %vm558, %v780, 0
    %v798 = vsel %vm558, %v782, 0
    %v801 = vsel %vm558, %v784, 0
    %803 = vmatprep.subr.bf16.mxu0 0
    %804 = vmatpush1.bf16.xpose.msra.mxu0 %v795
    %805 = vmatprep.subr.bf16.mxu0 0
    %806 = vmatpush1.bf16.xpose.msra.mxu0 %v798
    %807 = vmatprep.subr.bf16.mxu0 0
    %808 = vmatpush1.bf16.xpose.msra.mxu0 %v801
    %809 = vmatprep.subr.bf16.mxu0 0
    %810 = vmatpush1.bf16.xpose.msra.mxu0 0
    %811 = vmatprep.subr.bf16.mxu0 0
    %812 = vmatpush1.bf16.xpose.msra.mxu0 0
    %813 = vmatprep.subr.bf16.mxu0 0
    %814 = vmatpush1.bf16.xpose.msra.mxu0 0
    %815 = vmatprep.subr.bf16.mxu0 0
    %816 = vmatpush1.bf16.xpose.msra.mxu0 0
    %817 = vmatprep.subr.bf16.mxu0 0
    %818 = vmatpush1.bf16.xpose.msra.mxu0 0
    %819 = vmatprep.subr.bf16.mxu0 0
    %820 = vmatpush1.bf16.xpose.msra.mxu0 0
    %821 = vmatprep.subr.bf16.mxu0 0
    %822 = vmatpush1.bf16.xpose.msra.mxu0 0
    %823 = vmatprep.subr.bf16.mxu0 0
    %824 = vmatpush1.bf16.xpose.msra.mxu0 0
    %825 = vmatprep.subr.bf16.mxu0 0
    %826 = vmatpush1.bf16.xpose.msra.mxu0 0
    %827 = vmatprep.subr.bf16.mxu0 0
    %828 = vmatpush1.bf16.xpose.msra.mxu0 0
    %829 = vmatprep.subr.bf16.mxu0 0
    %830 = vmatpush1.bf16.xpose.msra.mxu0 0
    %831 = vmatprep.subr.bf16.mxu0 0
    %832 = vmatpush1.bf16.xpose.msra.mxu0 0
    %833 = vmatprep.subr.bf16.mxu0 0
    %834 = vmatpush1.bf16.xpose.msra.mxu0 0
    %835 = vmatprep.mubr.bf16.mxu0 0
    %836 = vmatmul.mubr.bf16.gmra.mrb[0].mxu0 %v786
    %v837 = vpop.f32.mrb[0].mxu0
    %v838 = vadd.f32 %v143, %v837
    %v839 = vpop.f32.mrb[0].mxu0
    %v840 = vpop.f32.mrb[0].mxu0
    %v841 = vadd.f32 %v144, %v840
    %v842 = vpop.f32.mrb[0].mxu0
    %843 = vmatprep.mubr.bf16.mxu0 0
    %844 = vmatmul.mubr.bf16.gmra.mrb[0].mxu0 %v789
    %v845 = vpop.f32.mrb[0].mxu0
    %v846 = vadd.f32 %v145, %v845
    %v847 = vpop.f32.mrb[0].mxu0
    %v848 = vpop.f32.mrb[0].mxu0
    %v849 = vadd.f32 %v146, %v848
    %v850 = vpop.f32.mrb[0].mxu0
    %851 = vmatprep.mubr.bf16.mxu0 0
    %852 = vmatmul.mubr.bf16.gmra.mrb[0].mxu0 %v792
    %v853 = vpop.f32.mrb[0].mxu0
    %v854 = vadd.f32 %v147, %v853
    %v855 = vpop.f32.mrb[0].mxu0
    %v856 = vpop.f32.mrb[0].mxu0
    %v857 = vpop.f32.mrb[0].mxu0
    %858 = vdwg.mxu0
    %v859 = vsel %vm633, %v838, -inf
    %860 = vmax.xlane.f32.xlu0 %v859
    %v861 = vpop.xlane.xlu0 %860
    %v862 = vsel %vm633, %v841, -inf
    %863 = vmax.xlane.f32.xlu0 %v862
    %v864 = vpop.xlane.xlu0 %863
    %v865 = vsel %vm633, %v846, -inf
    %866 = vmax.xlane.f32.xlu0 %v865
    %v867 = vpop.xlane.xlu0 %866
    %v868 = vsel %vm633, %v849, -inf
    %869 = vmax.xlane.f32.xlu0 %v868
    %v870 = vpop.xlane.xlu0 %869
    %v871 = vsel %vm646, %v854, -inf
    %872 = vmax.xlane.f32.xlu0 %v871
    %v873 = vpop.xlane.xlu0 %872
    %v874 = vsub.f32 %v838, %v861
    %v875 = vsub.f32 %v841, %v864
    %v876 = vsub.f32 %v846, %v867
    %v877 = vsub.f32 %v849, %v870
    %v878 = vsub.f32 %v854, %v873
    %v879 = vmul.f32 %v874, 1.442695
    %v880 = vpow.pop %v879
    %v881 = vmul.f32 %v875, 1.442695
    %v882 = vpow.pop %v881
    %v883 = vmul.f32 %v876, 1.442695
    %v884 = vpow.pop %v883
    %v885 = vmul.f32 %v877, 1.442695
    %v886 = vpow.pop %v885
    %v887 = vmul.f32 %v878, 1.442695
    %v888 = vpow.pop %v887
    %v889 = vsel %vm633, %v880, 0.0
    %890 = vadd.xlane.f32.xlu0 %v889
    %v891 = vpop.xlane.xlu0 %890
    %v892 = vsel %vm633, %v882, 0.0
    %893 = vadd.xlane.f32.xlu0 %v892
    %v894 = vpop.xlane.xlu0 %893
    %v895 = vsel %vm633, %v884, 0.0
    %896 = vadd.xlane.f32.xlu0 %v895
    %v897 = vpop.xlane.xlu0 %896
    %v898 = vsel %vm633, %v886, 0.0
    %899 = vadd.xlane.f32.xlu0 %v898
    %v900 = vpop.xlane.xlu0 %899
    %v901 = vsel %vm646, %v888, 0.0
    %902 = vadd.xlane.f32.xlu0 %v901
    %v903 = vpop.xlane.xlu0 %902
    %v904 = vrcp.pop %v891
    %v905 = vrcp.pop %v894
    %v906 = vrcp.pop %v897
    %v907 = vrcp.pop %v900
    %v908 = vrcp.pop %v903
    %v909 = vmul.f32 %v880, %v904
    %v910 = vmul.f32 %v882, %v905
    %v911 = vmul.f32 %v884, %v906
    %v912 = vmul.f32 %v886, %v907
    %v913 = vmul.f32 %v888, %v908
    %v914 = vpack.c.bf16 %v910, %v909
    %v915 = vpack.c.bf16 %v912, %v911
    %v916 = vpack.c.bf16 %v913, %v913
    %917 = vrot.lane.b32.xlu0 %v546, 48
    %v918 = vpop.permute.xlu0 %917
    %919 = vrot.lane.b32.xlu0 %v547, 48
    %v920 = vpop.permute.xlu0 %919
    %921 = vrot.lane.b32.xlu0 %v548, 48
    %v922 = vpop.permute.xlu0 %921
    %v926 = vsel %vm633, %v914, 0
    %v929 = vsel %vm633, %v915, 0
    %v932 = vsel %vm633, %v916, 0
    %v935 = vsel %vm710, %v922, 0
    %937 = vmatprep.subr.bf16.mxu0 0
    %938 = vmatpush1.bf16.msra.mxu0 %v918
    %939 = vmatprep.subr.bf16.mxu0 0
    %940 = vmatpush1.bf16.msra.mxu0 %v920
    %941 = vmatprep.subr.bf16.mxu0 0
    %942 = vmatpush1.bf16.msra.mxu0 %v935
    %943 = vmatprep.subr.bf16.mxu0 0
    %944 = vmatpush1.bf16.msra.mxu0 0
    %945 = vmatprep.subr.bf16.mxu0 0
    %946 = vmatpush1.bf16.msra.mxu0 0
    %947 = vmatprep.subr.bf16.mxu0 0
    %948 = vmatpush1.bf16.msra.mxu0 0
    %949 = vmatprep.subr.bf16.mxu0 0
    %950 = vmatpush1.bf16.msra.mxu0 0
    %951 = vmatprep.subr.bf16.mxu0 0
    %952 = vmatpush1.bf16.msra.mxu0 0
    %953 = vmatprep.subr.bf16.mxu0 0
    %954 = vmatpush1.bf16.msra.mxu0 0
    %955 = vmatprep.subr.bf16.mxu0 0
    %956 = vmatpush1.bf16.msra.mxu0 0
    %957 = vmatprep.subr.bf16.mxu0 0
    %958 = vmatpush1.bf16.msra.mxu0 0
    %959 = vmatprep.subr.bf16.mxu0 0
    %960 = vmatpush1.bf16.msra.mxu0 0
    %961 = vmatprep.subr.bf16.mxu0 0
    %962 = vmatpush1.bf16.msra.mxu0 0
    %963 = vmatprep.subr.bf16.mxu0 0
    %964 = vmatpush1.bf16.msra.mxu0 0
    %965 = vmatprep.subr.bf16.mxu0 0
    %966 = vmatpush1.bf16.msra.mxu0 0
    %967 = vmatprep.subr.bf16.mxu0 0
    %968 = vmatpush1.bf16.msra.mxu0 0
    %969 = vmatprep.mubr.bf16.mxu0 0
    %970 = vmatmul.mubr.bf16.gmra.mrb[0].mxu0 %v926
    %v971 = vpop.f32.mrb[0].mxu0
    %v972 = vadd.f32 0.0, %v971
    %v973 = vpop.f32.mrb[0].mxu0
    %v974 = vpop.f32.mrb[0].mxu0
    %v975 = vadd.f32 0.0, %v974
    %v976 = vpop.f32.mrb[0].mxu0
    %977 = vmatprep.mubr.bf16.mxu0 0
    %978 = vmatmul.mubr.bf16.gmra.mrb[0].mxu0 %v929
    %v979 = vpop.f32.mrb[0].mxu0
    %v980 = vadd.f32 0.0, %v979
    %v981 = vpop.f32.mrb[0].mxu0
    %v982 = vpop.f32.mrb[0].mxu0
    %v983 = vadd.f32 0.0, %v982
    %v984 = vpop.f32.mrb[0].mxu0
    %985 = vmatprep.mubr.bf16.mxu0 0
    %986 = vmatmul.mubr.bf16.gmra.mrb[0].mxu0 %v932
    %v987 = vpop.f32.mrb[0].mxu0
    %v988 = vadd.f32 0.0, %v987
    %v989 = vpop.f32.mrb[0].mxu0
    %v990 = vpop.f32.mrb[0].mxu0
    %v991 = vpop.f32.mrb[0].mxu0
    %992 = vdwg.mxu0
    %998 = vrot.lane.b32.xlu0 %v972, 16
    %v999 = vpop.permute.xlu0 %998
    %1000 = vrot.lane.b32.xlu0 %v975, 16
    %v1001 = vpop.permute.xlu0 %1000
    %1002 = vrot.lane.b32.xlu0 %v980, 16
    %v1003 = vpop.permute.xlu0 %1002
    %1004 = vrot.lane.b32.xlu0 %v983, 16
    %v1005 = vpop.permute.xlu0 %1004
    %1006 = vrot.lane.b32.xlu0 %v988, 16
    %v1007 = vpop.permute.xlu0 %1006
    %v1013 = vsel %vm558, %v749, %v999
    %v1014 = vsel %vm558, %v752, %v1001
    %v1015 = vsel %vm558, %v757, %v1003
    %v1016 = vsel %vm558, %v760, %v1005
    %v1017 = vsel %vm558, %v765, %v1007
    %v1018 = vld [vmem:[%s10] sm:$0xf]
    %v1019 = vld [vmem:[%s10 + $0x4] sm:$0xf]
    %v1020 = vld [vmem:[%s10 + $0x8] sm:$0xf]
    %v1021 = vld [vmem:[%s10 + $0xc] sm:$0xf]
    %v1022 = vpack.c.bf16 %v1014, %v1013
    %v1023 = vpack.c.bf16 %v1016, %v1015
    %v1024 = vpack.c.bf16 %v1017, %v1017
    %v1025 = vld [vmem:[#allocation10] sm:$0x1]
    %v1027 = vlaneseq
    %v1028 = vshrl.u32 %v1027, 7
    %v1029 = vsub.s32 0, %v1028
    %v1030 = vrot.slane %v1025, %v1029
    %v1036 = vunpack.c.l.b16 %v1018
    %v1037 = vunpack.c.l.b16 %v1019
    %v1038 = vunpack.c.l.b16 %v1020
    %v1039 = vunpack.c.l.b16 %v1021
    %v1040 = vpack.c.b16 %v1037, %v1036
    %v1041 = vpack.c.b16 %v1039, %v1038
    %v1045 = vsel %vm268, %v1022, 0
    %v1048 = vsel %vm268, %v1023, 0
    %v1051 = vsel %vm268, %v1024, 0
    %1053 = vmatprep.subr.bf16.mxu0 0
    %1054 = vmatpush1.bf16.msra.mxu0 %v1040
    %1055 = vmatprep.subr.bf16.mxu0 0
    %1056 = vmatpush1.bf16.msra.mxu0 %v1041
    %1057 = vmatprep.subr.bf16.mxu0 0
    %1058 = vmatpush1.bf16.msra.mxu0 0
    %1059 = vmatprep.subr.bf16.mxu0 0
    %1060 = vmatpush1.bf16.msra.mxu0 0
    %1061 = vmatprep.subr.bf16.mxu0 0
    %1062 = vmatpush1.bf16.msra.mxu0 0
    %1063 = vmatprep.subr.bf16.mxu0 0
    %1064 = vmatpush1.bf16.msra.mxu0 0
    %1065 = vmatprep.subr.bf16.mxu0 0
    %1066 = vmatpush1.bf16.msra.mxu0 0
    %1067 = vmatprep.subr.bf16.mxu0 0
    %1068 = vmatpush1.bf16.msra.mxu0 0
    %1069 = vmatprep.subr.bf16.mxu0 0
    %1070 = vmatpush1.bf16.msra.mxu0 0
    %1071 = vmatprep.subr.bf16.mxu0 0
    %1072 = vmatpush1.bf16.msra.mxu0 0
    %1073 = vmatprep.subr.bf16.mxu0 0
    %1074 = vmatpush1.bf16.msra.mxu0 0
    %1075 = vmatprep.subr.bf16.mxu0 0
    %1076 = vmatpush1.bf16.msra.mxu0 0
    %1077 = vmatprep.subr.bf16.mxu0 0
    %1078 = vmatpush1.bf16.msra.mxu0 0
    %1079 = vmatprep.subr.bf16.mxu0 0
    %1080 = vmatpush1.bf16.msra.mxu0 0
    %1081 = vmatprep.subr.bf16.mxu0 0
    %1082 = vmatpush1.bf16.msra.mxu0 0
    %1083 = vmatprep.subr.bf16.mxu0 0
    %1084 = vmatpush1.bf16.msra.mxu0 0
    %1085 = vmatprep.mubr.bf16.mxu0 0
    %1086 = vmatmul.mubr.bf16.gmra.mrb[0].mxu0 %v1045
    %v1087 = vpop.f32.mrb[0].mxu0
    %v1088 = vadd.f32 %v1030, %v1087
    %v1089 = vpop.f32.mrb[0].mxu0
    %v1090 = vpop.f32.mrb[0].mxu0
    %v1091 = vadd.f32 %v1030, %v1090
    %v1092 = vpop.f32.mrb[0].mxu0
    %1093 = vmatprep.mubr.bf16.mxu0 0
    %1094 = vmatmul.mubr.bf16.gmra.mrb[0].mxu0 %v1048
    %v1095 = vpop.f32.mrb[0].mxu0
    %v1096 = vadd.f32 %v1030, %v1095
    %v1097 = vpop.f32.mrb[0].mxu0
    %v1098 = vpop.f32.mrb[0].mxu0
    %v1099 = vadd.f32 %v1030, %v1098
    %v1100 = vpop.f32.mrb[0].mxu0
    %1101 = vmatprep.mubr.bf16.mxu0 0
    %1102 = vmatmul.mubr.bf16.gmra.mrb[0].mxu0 %v1051
    %v1103 = vpop.f32.mrb[0].mxu0
    %v1104 = vadd.f32 %v1030, %v1103
    %v1105 = vpop.f32.mrb[0].mxu0
    %v1106 = vpop.f32.mrb[0].mxu0
    %v1107 = vpop.f32.mrb[0].mxu0
    %1108 = vdwg.mxu0
    %v1109 = vadd.f32 %v353, %v1088
    %v1110 = vadd.f32 %v354, %v1091
    %v1111 = vadd.f32 %v355, %v1096
    %v1112 = vadd.f32 %v356, %v1099
    %v1113 = vadd.f32 %v357, %v1104
    %v1114 = vld [vmem:[#allocation11] sm:$0x1]
    %v1115 = vld [vmem:[%s13] sm:$0x1]
    %v1116 = vsel %vm268, %v1109, 0.0
    %1117 = vadd.xlane.f32.xlu0 %v1116
    %v1118 = vpop.xlane.xlu0 %1117
    %v1119 = vsel %vm268, %v1110, 0.0
    %1120 = vadd.xlane.f32.xlu0 %v1119
    %v1121 = vpop.xlane.xlu0 %1120
    %v1122 = vsel %vm268, %v1111, 0.0
    %1123 = vadd.xlane.f32.xlu0 %v1122
    %v1124 = vpop.xlane.xlu0 %1123
    %v1125 = vsel %vm268, %v1112, 0.0
    %1126 = vadd.xlane.f32.xlu0 %v1125
    %v1127 = vpop.xlane.xlu0 %1126
    %v1128 = vsel %vm281, %v1113, 0.0
    %1129 = vadd.xlane.f32.xlu0 %v1128
    %v1130 = vpop.xlane.xlu0 %1129
    %v1131 = vmul.f32 %v1118, %v285
    %v1132 = vmul.f32 %v1121, %v285
    %v1133 = vmul.f32 %v1124, %v285
    %v1134 = vmul.f32 %v1127, %v285
    %v1135 = vmul.f32 %v1130, %v285
    %v1136 = vsub.f32 %v1109, %v1131
    %v1137 = vsub.f32 %v1110, %v1132
    %v1138 = vsub.f32 %v1111, %v1133
    %v1139 = vsub.f32 %v1112, %v1134
    %v1140 = vsub.f32 %v1113, %v1135
    %v1141 = vmul.f32 %v1136, %v1136
    %v1142 = vmul.f32 %v1137, %v1137
    %v1143 = vmul.f32 %v1138, %v1138
    %v1144 = vmul.f32 %v1139, %v1139
    %v1145 = vmul.f32 %v1140, %v1140
    %v1146 = vsel %vm268, %v1141, 0.0
    %1147 = vadd.xlane.f32.xlu0 %v1146
    %v1148 = vpop.xlane.xlu0 %1147
    %v1149 = vsel %vm268, %v1142, 0.0
    %1150 = vadd.xlane.f32.xlu0 %v1149
    %v1151 = vpop.xlane.xlu0 %1150
    %v1152 = vsel %vm268, %v1143, 0.0
    %1153 = vadd.xlane.f32.xlu0 %v1152
    %v1154 = vpop.xlane.xlu0 %1153
    %v1155 = vsel %vm268, %v1144, 0.0
    %1156 = vadd.xlane.f32.xlu0 %v1155
    %v1157 = vpop.xlane.xlu0 %1156
    %v1158 = vsel %vm281, %v1145, 0.0
    %1159 = vadd.xlane.f32.xlu0 %v1158
    %v1160 = vpop.xlane.xlu0 %1159
    %v1161 = vmul.f32 %v1148, %v285
    %v1162 = vmul.f32 %v1151, %v285
    %v1163 = vmul.f32 %v1154, %v285
    %v1164 = vmul.f32 %v1157, %v285
    %v1165 = vmul.f32 %v1160, %v285
    %v1166 = vadd.f32 %v1161, 1e-05
    %v1167 = vadd.f32 %v1162, 1e-05
    %v1168 = vadd.f32 %v1163, 1e-05
    %v1169 = vadd.f32 %v1164, 1e-05
    %v1170 = vadd.f32 %v1165, 1e-05
    %v1171 = vrsqrt.pop %v1166
    %v1172 = vrsqrt.pop %v1167
    %v1173 = vrsqrt.pop %v1168
    %v1174 = vrsqrt.pop %v1169
    %v1175 = vrsqrt.pop %v1170
    %v1176 = vmul.f32 %v1136, %v1171
    %v1177 = vmul.f32 %v1137, %v1172
    %v1178 = vmul.f32 %v1138, %v1173
    %v1179 = vmul.f32 %v1139, %v1174
    %v1180 = vmul.f32 %v1140, %v1175
    %v1182 = vlaneseq
    %v1183 = vshrl.u32 %v1182, 7
    %v1184 = vsub.s32 0, %v1183
    %v1185 = vrot.slane %v1114, %v1184
    %v1187 = vmul.f32 %v1176, %v1185
    %v1188 = vmul.f32 %v1177, %v1185
    %v1189 = vmul.f32 %v1178, %v1185
    %v1190 = vmul.f32 %v1179, %v1185
    %v1191 = vmul.f32 %v1180, %v1185
    %v1193 = vlaneseq
    %v1194 = vshrl.u32 %v1193, 7
    %v1195 = vsub.s32 0, %v1194
    %v1196 = vrot.slane %v1115, %v1195
    %v1198 = vadd.f32 %v1187, %v1196
    %v1199 = vadd.f32 %v1188, %v1196
    %v1200 = vadd.f32 %v1189, %v1196
    %v1201 = vadd.f32 %v1190, %v1196
    %v1202 = vadd.f32 %v1191, %v1196
    %v1203 = vld [vmem:[%s14] sm:$0xf]
    %v1204 = vld [vmem:[%s14 + $0x4] sm:$0xf]
    %v1205 = vld [vmem:[%s14 + $0x8] sm:$0xf]
    %v1206 = vld [vmem:[%s14 + $0xc] sm:$0xf]
    %v1207 = vpack.c.bf16 %v1199, %v1198
    %v1208 = vpack.c.bf16 %v1201, %v1200
    %v1209 = vpack.c.bf16 %v1202, %v1202
    %v1210 = vld [vmem:[%s15] sm:$0x1]
    %v1212 = vlaneseq
    %v1213 = vshrl.u32 %v1212, 7
    %v1214 = vsub.s32 0, %v1213
    %v1215 = vrot.slane %v1210, %v1214
    %v1221 = vunpack.c.l.b16 %v1203
    %v1222 = vunpack.c.l.b16 %v1204
    %v1223 = vunpack.c.l.b16 %v1205
    %v1224 = vunpack.c.l.b16 %v1206
    %v1225 = vpack.c.b16 %v1222, %v1221
    %v1226 = vpack.c.b16 %v1224, %v1223
    %v1230 = vsel %vm268, %v1207, 0
    %v1233 = vsel %vm268, %v1208, 0
    %v1236 = vsel %vm268, %v1209, 0
    %1238 = vmatprep.subr.bf16.mxu0 0
    %1239 = vmatpush1.bf16.msra.mxu0 %v1225
    %1240 = vmatprep.subr.bf16.mxu0 0
    %1241 = vmatpush1.bf16.msra.mxu0 %v1226
    %1242 = vmatprep.subr.bf16.mxu0 0
    %1243 = vmatpush1.bf16.msra.mxu0 0
    %1244 = vmatprep.subr.bf16.mxu0 0
    %1245 = vmatpush1.bf16.msra.mxu0 0
    %1246 = vmatprep.subr.bf16.mxu0 0
    %1247 = vmatpush1.bf16.msra.mxu0 0
    %1248 = vmatprep.subr.bf16.mxu0 0
    %1249 = vmatpush1.bf16.msra.mxu0 0
    %1250 = vmatprep.subr.bf16.mxu0 0
    %1251 = vmatpush1.bf16.msra.mxu0 0
    %1252 = vmatprep.subr.bf16.mxu0 0
    %1253 = vmatpush1.bf16.msra.mxu0 0
    %1254 = vmatprep.subr.bf16.mxu0 0
    %1255 = vmatpush1.bf16.msra.mxu0 0
    %1256 = vmatprep.subr.bf16.mxu0 0
    %1257 = vmatpush1.bf16.msra.mxu0 0
    %1258 = vmatprep.subr.bf16.mxu0 0
    %1259 = vmatpush1.bf16.msra.mxu0 0
    %1260 = vmatprep.subr.bf16.mxu0 0
    %1261 = vmatpush1.bf16.msra.mxu0 0
    %1262 = vmatprep.subr.bf16.mxu0 0
    %1263 = vmatpush1.bf16.msra.mxu0 0
    %1264 = vmatprep.subr.bf16.mxu0 0
    %1265 = vmatpush1.bf16.msra.mxu0 0
    %1266 = vmatprep.subr.bf16.mxu0 0
    %1267 = vmatpush1.bf16.msra.mxu0 0
    %1268 = vmatprep.subr.bf16.mxu0 0
    %1269 = vmatpush1.bf16.msra.mxu0 0
    %1270 = vmatprep.mubr.bf16.mxu0 0
    %1271 = vmatmul.mubr.bf16.gmra.mrb[0].mxu0 %v1230
    %v1272 = vpop.f32.mrb[0].mxu0
    %v1273 = vadd.f32 %v1215, %v1272
    %v1274 = vpop.f32.mrb[0].mxu0
    %v1275 = vpop.f32.mrb[0].mxu0
    %v1276 = vadd.f32 %v1215, %v1275
    %v1277 = vpop.f32.mrb[0].mxu0
    %1278 = vmatprep.mubr.bf16.mxu0 0
    %1279 = vmatmul.mubr.bf16.gmra.mrb[0].mxu0 %v1233
    %v1280 = vpop.f32.mrb[0].mxu0
    %v1281 = vadd.f32 %v1215, %v1280
    %v1282 = vpop.f32.mrb[0].mxu0
    %v1283 = vpop.f32.mrb[0].mxu0
    %v1284 = vadd.f32 %v1215, %v1283
    %v1285 = vpop.f32.mrb[0].mxu0
    %1286 = vmatprep.mubr.bf16.mxu0 0
    %1287 = vmatmul.mubr.bf16.gmra.mrb[0].mxu0 %v1236
    %v1288 = vpop.f32.mrb[0].mxu0
    %v1289 = vadd.f32 %v1215, %v1288
    %v1290 = vpop.f32.mrb[0].mxu0
    %v1291 = vpop.f32.mrb[0].mxu0
    %v1292 = vpop.f32.mrb[0].mxu0
    %1293 = vdwg.mxu0
    %v1294 = vmul.f32 %v1273, 1.702
    %v1295 = vmul.f32 %v1276, 1.702
    %v1296 = vmul.f32 %v1281, 1.702
    %v1297 = vmul.f32 %v1284, 1.702
    %v1298 = vmul.f32 %v1289, 1.702
    %v1299 = vxor.u32 %v1294, 2147483648
    %v1300 = vxor.u32 %v1295, 2147483648
    %v1301 = vxor.u32 %v1296, 2147483648
    %v1302 = vxor.u32 %v1297, 2147483648
    %v1303 = vxor.u32 %v1298, 2147483648
    %v1304 = vmul.f32 %v1299, 1.442695
    %v1305 = vpow.pop %v1304
    %v1306 = vmul.f32 %v1300, 1.442695
    %v1307 = vpow.pop %v1306
    %v1308 = vmul.f32 %v1301, 1.442695
    %v1309 = vpow.pop %v1308
    %v1310 = vmul.f32 %v1302, 1.442695
    %v1311 = vpow.pop %v1310
    %v1312 = vmul.f32 %v1303, 1.442695
    %v1313 = vpow.pop %v1312
    %v1314 = vadd.f32 %v1305, 1.0
    %v1315 = vadd.f32 %v1307, 1.0
    %v1316 = vadd.f32 %v1309, 1.0
    %v1317 = vadd.f32 %v1311, 1.0
    %v1318 = vadd.f32 %v1313, 1.0
    %v1319 = vrcp.pop %v1314
    %v1320 = vmul.f32 1.0, %v1319
    %v1321 = vrcp.pop %v1315
    %v1322 = vmul.f32 1.0, %v1321
    %v1323 = vrcp.pop %v1316
    %v1324 = vmul.f32 1.0, %v1323
    %v1325 = vrcp.pop %v1317
    %v1326 = vmul.f32 1.0, %v1325
    %v1327 = vrcp.pop %v1318
    %v1328 = vmul.f32 1.0, %v1327
    %v1329 = vmul.f32 %v1273, %v1320
    %v1330 = vmul.f32 %v1276, %v1322
    %v1331 = vmul.f32 %v1281, %v1324
    %v1332 = vmul.f32 %v1284, %v1326
    %v1333 = vmul.f32 %v1289, %v1328
    %v1334 = vld [vmem:[%s16] sm:$0xf]
    %v1335 = vld [vmem:[%s16 + $0x4] sm:$0xf]
    %v1336 = vld [vmem:[%s16 + $0x8] sm:$0xf]
    %v1337 = vld [vmem:[%s16 + $0xc] sm:$0xf]
    %v1338 = vld [vmem:[%s16 + $0x10] sm:$0xf]
    %v1339 = vld [vmem:[%s16 + $0x14] sm:$0xf]
    %v1340 = vld [vmem:[%s16 + $0x18] sm:$0xf]
    %v1341 = vld [vmem:[%s16 + $0x1c] sm:$0xf]
    %v1342 = vpack.c.bf16 %v1330, %v1329
    %v1343 = vpack.c.bf16 %v1332, %v1331
    %v1344 = vpack.c.bf16 %v1333, %v1333
    %v1353 = vunpack.c.l.b16 %v1334
    %v1354 = vunpack.c.l.b16 %v1335
    %v1355 = vunpack.c.l.b16 %v1336
    %v1356 = vunpack.c.l.b16 %v1337
    %v1357 = vunpack.c.l.b16 %v1338
    %v1358 = vunpack.c.l.b16 %v1339
    %v1359 = vunpack.c.l.b16 %v1340
    %v1360 = vunpack.c.l.b16 %v1341
    %v1361 = vpack.c.b16 %v1354, %v1353
    %v1362 = vpack.c.b16 %v1356, %v1355
    %v1363 = vpack.c.b16 %v1358, %v1357
    %v1364 = vpack.c.b16 %v1360, %v1359
    %vm1369 = vcmask 523264
    %v1371 = vsel %vm1369, %v1342, 0
    %v1374 = vsel %vm1369, %v1343, 0
    %v1377 = vsel %vm1369, %v1344, 0
    %1379 = vmatprep.subr.bf16.mxu0 0
    %1380 = vmatpush1.bf16.msra.mxu0 %v1361
    %1381 = vmatprep.subr.bf16.mxu0 0
    %1382 = vmatpush1.bf16.msra.mxu0 %v1362
    %1383 = vmatprep.subr.bf16.mxu0 0
    %1384 = vmatpush1.bf16.msra.mxu0 %v1363
    %1385 = vmatprep.subr.bf16.mxu0 0
    %1386 = vmatpush1.bf16.msra.mxu0 %v1364
    %1387 = vmatprep.subr.bf16.mxu0 0
    %1388 = vmatpush1.bf16.msra.mxu0 0
    %1389 = vmatprep.subr.bf16.mxu0 0
    %1390 = vmatpush1.bf16.msra.mxu0 0
    %1391 = vmatprep.subr.bf16.mxu0 0
    %1392 = vmatpush1.bf16.msra.mxu0 0
    %1393 = vmatprep.subr.bf16.mxu0 0
    %1394 = vmatpush1.bf16.msra.mxu0 0
    %1395 = vmatprep.subr.bf16.mxu0 0
    %1396 = vmatpush1.bf16.msra.mxu0 0
    %1397 = vmatprep.subr.bf16.mxu0 0
    %1398 = vmatpush1.bf16.msra.mxu0 0
    %1399 = vmatprep.subr.bf16.mxu0 0
    %1400 = vmatpush1.bf16.msra.mxu0 0
    %1401 = vmatprep.subr.bf16.mxu0 0
    %1402 = vmatpush1.bf16.msra.mxu0 0
    %1403 = vmatprep.subr.bf16.mxu0 0
    %1404 = vmatpush1.bf16.msra.mxu0 0
    %1405 = vmatprep.subr.bf16.mxu0 0
    %1406 = vmatpush1.bf16.msra.mxu0 0
    %1407 = vmatprep.subr.bf16.mxu0 0
    %1408 = vmatpush1.bf16.msra.mxu0 0
    %1409 = vmatprep.subr.bf16.mxu0 0
    %1410 = vmatpush1.bf16.msra.mxu0 0
    %1411 = vmatprep.mubr.bf16.mxu0 0
    %1412 = vmatmul.mubr.bf16.gmra.mrb[0].mxu0 %v1371
    %v1413 = vpop.f32.mrb[0].mxu0
    %v1414 = vadd.f32 0.0, %v1413
    %v1415 = vpop.f32.mrb[0].mxu0
    %v1416 = vpop.f32.mrb[0].mxu0
    %v1417 = vadd.f32 0.0, %v1416
    %v1418 = vpop.f32.mrb[0].mxu0
    %1419 = vmatprep.mubr.bf16.mxu0 0
    %1420 = vmatmul.mubr.bf16.gmra.mrb[0].mxu0 %v1374
    %v1421 = vpop.f32.mrb[0].mxu0
    %v1422 = vadd.f32 0.0, %v1421
    %v1423 = vpop.f32.mrb[0].mxu0
    %v1424 = vpop.f32.mrb[0].mxu0
    %v1425 = vadd.f32 0.0, %v1424
    %v1426 = vpop.f32.mrb[0].mxu0
    %1427 = vmatprep.mubr.bf16.mxu0 0
    %1428 = vmatmul.mubr.bf16.gmra.mrb[0].mxu0 %v1377
    %v1429 = vpop.f32.mrb[0].mxu0
    %v1430 = vadd.f32 0.0, %v1429
    %v1431 = vpop.f32.mrb[0].mxu0
    %v1432 = vpop.f32.mrb[0].mxu0
    %v1433 = vpop.f32.mrb[0].mxu0
    %1434 = vdwg.mxu0
    %v1435 = vadd.f32 %v1109, %v1414
    %v1436 = vadd.f32 %v1110, %v1417
    %v1437 = vadd.f32 %v1111, %v1422
    %v1438 = vadd.f32 %v1112, %v1425
    %v1439 = vadd.f32 %v1113, %v1430
    %v1440 = vld [vmem:[%s17] sm:$0x1]
    %v1442 = vlaneseq
    %v1443 = vshrl.u32 %v1442, 7
    %v1444 = vsub.s32 0, %v1443
    %v1445 = vrot.slane %v1440, %v1444
    %v1447 = vadd.f32 %v1435, %v1445
    %v1448 = vadd.f32 %v1436, %v1445
    %v1449 = vadd.f32 %v1437, %v1445
    %v1450 = vadd.f32 %v1438, %v1445
    %v1451 = vadd.f32 %v1439, %v1445
    %vm1455 = vcmask 1046528
    %v1456 = vrot.slane %v1447, 1
    %v1457 = vrot.slane %v1448, 1
    %v1458 = vsel %vm1455, %v1456, %v1457
    %v1459 = vrot.slane %v1449, 1
    %v1460 = vsel %vm1455, %v1457, %v1459
    %vm1465 = vcmask 1045504
    %v1466 = vrot.slane %v1449, 2
    %v1467 = vrot.slane %v1450, 2
    %v1468 = vsel %vm1465, %v1466, %v1467
    %v1469 = vrot.slane %v1451, 2
    %v1470 = vsel %vm1465, %v1467, %v1469
    %v1473 = vld [vmem:[%s18] sm:$0xf]
    %v1474 = vld [vmem:[%s18 + $0x4] sm:$0xf]
    %v1475 = vld [vmem:[%s18 + $0x8] sm:$0xf]
    %v1476 = vld [vmem:[%s18 + $0xc] sm:$0xf]
    %v1477 = vpack.c.bf16 %v1460, %v1458
    %v1478 = vpack.c.bf16 %v1470, %v1468
    %v1479 = vld [vmem:[%s19] sm:$0x1]
    %v1481 = vlaneseq
    %v1482 = vshrl.u32 %v1481, 7
    %v1483 = vsub.s32 0, %v1482
    %v1484 = vrot.slane %v1479, %v1483
    %v1490 = vunpack.c.l.b16 %v1473
    %v1491 = vunpack.c.l.b16 %v1474
    %v1492 = vunpack.c.l.b16 %v1475
    %v1493 = vunpack.c.l.b16 %v1476
    %v1494 = vpack.c.b16 %v1491, %v1490
    %v1495 = vpack.c.b16 %v1493, %v1492
    %v1499 = vsel %vm268, %v1477, 0
    %v1502 = vsel %vm268, %v1478, 0
    %1504 = vmatprep.subr.bf16.mxu0 0
    %1505 = vmatpush1.bf16.msra.mxu0 %v1494
    %1506 = vmatprep.subr.bf16.mxu0 0
    %1507 = vmatpush1.bf16.msra.mxu0 %v1495
    %1508 = vmatprep.subr.bf16.mxu0 0
    %1509 = vmatpush1.bf16.msra.mxu0 0
    %1510 = vmatprep.subr.bf16.mxu0 0
    %1511 = vmatpush1.bf16.msra.mxu0 0
    %1512 = vmatprep.subr.bf16.mxu0 0
    %1513 = vmatpush1.bf16.msra.mxu0 0
    %1514 = vmatprep.subr.bf16.mxu0 0
    %1515 = vmatpush1.bf16.msra.mxu0 0
    %1516 = vmatprep.subr.bf16.mxu0 0
    %1517 = vmatpush1.bf16.msra.mxu0 0
    %1518 = vmatprep.subr.bf16.mxu0 0
    %1519 = vmatpush1.bf16.msra.mxu0 0
    %1520 = vmatprep.subr.bf16.mxu0 0
    %1521 = vmatpush1.bf16.msra.mxu0 0
    %1522 = vmatprep.subr.bf16.mxu0 0
    %1523 = vmatpush1.bf16.msra.mxu0 0
    %1524 = vmatprep.subr.bf16.mxu0 0
    %1525 = vmatpush1.bf16.msra.mxu0 0
    %1526 = vmatprep.subr.bf16.mxu0 0
    %1527 = vmatpush1.bf16.msra.mxu0 0
    %1528 = vmatprep.subr.bf16.mxu0 0
    %1529 = vmatpush1.bf16.msra.mxu0 0
    %1530 = vmatprep.subr.bf16.mxu0 0
    %1531 = vmatpush1.bf16.msra.mxu0 0
    %1532 = vmatprep.subr.bf16.mxu0 0
    %1533 = vmatpush1.bf16.msra.mxu0 0
    %1534 = vmatprep.subr.bf16.mxu0 0
    %1535 = vmatpush1.bf16.msra.mxu0 0
    %1536 = vmatprep.mubr.bf16.mxu0 0
    %1537 = vmatmul.mubr.bf16.gmra.mrb[0].mxu0 %v1499
    %v1538 = vpop.f32.mrb[0].mxu0
    %v1539 = vadd.f32 %v1484, %v1538
    %v1540 = vpop.f32.mrb[0].mxu0
    %v1541 = vpop.f32.mrb[0].mxu0
    %v1542 = vadd.f32 %v1484, %v1541
    %v1543 = vpop.f32.mrb[0].mxu0
    %1544 = vmatprep.mubr.bf16.mxu0 0
    %1545 = vmatmul.mubr.bf16.gmra.mrb[0].mxu0 %v1502
    %v1546 = vpop.f32.mrb[0].mxu0
    %v1547 = vadd.f32 %v1484, %v1546
    %v1548 = vpop.f32.mrb[0].mxu0
    %v1549 = vpop.f32.mrb[0].mxu0
    %v1550 = vadd.f32 %v1484, %v1549
    %v1551 = vpop.f32.mrb[0].mxu0
    %1552 = vdwg.mxu0
    %v1553 = vmul.f32 %v1539, %v1539
    %v1554 = vmul.f32 %v1542, %v1542
    %v1555 = vmul.f32 %v1547, %v1547
    %v1556 = vmul.f32 %v1550, %v1550
    %v1557 = vmul.f32 %v1539, %v1553
    %v1558 = vmul.f32 %v1542, %v1554
    %v1559 = vmul.f32 %v1547, %v1555
    %v1560 = vmul.f32 %v1550, %v1556
    %v1561 = vmul.f32 %v1557, 0.044715
    %v1562 = vmul.f32 %v1558, 0.044715
    %v1563 = vmul.f32 %v1559, 0.044715
    %v1564 = vmul.f32 %v1560, 0.044715
    %v1565 = vadd.f32 %v1539, %v1561
    %v1566 = vadd.f32 %v1542, %v1562
    %v1567 = vadd.f32 %v1547, %v1563
    %v1568 = vadd.f32 %v1550, %v1564
    %v1569 = vmul.f32 %v1565, 0.7978846
    %v1570 = vmul.f32 %v1566, 0.7978846
    %v1571 = vmul.f32 %v1567, 0.7978846
    %v1572 = vmul.f32 %v1568, 0.7978846
    %v1573 = vtanh.pop %v1569
    %v1574 = vtanh.pop %v1570
    %v1575 = vtanh.pop %v1571
    %v1576 = vtanh.pop %v1572
    %v1577 = vadd.f32 %v1573, 1.0
    %v1578 = vadd.f32 %v1574, 1.0
    %v1579 = vadd.f32 %v1575, 1.0
    %v1580 = vadd.f32 %v1576, 1.0
    %v1581 = vmul.f32 %v1577, 0.5
    %v1582 = vmul.f32 %v1578, 0.5
    %v1583 = vmul.f32 %v1579, 0.5
    %v1584 = vmul.f32 %v1580, 0.5
    %v1585 = vmul.f32 %v1539, %v1581
    %v1586 = vmul.f32 %v1542, %v1582
    %v1587 = vmul.f32 %v1547, %v1583
    %v1588 = vmul.f32 %v1550, %v1584
    %v1589 = vld [vmem:[%s20] sm:$0xf]
    %v1590 = vld [vmem:[%s20 + $0x4] sm:$0xf]
    %v1591 = vld [vmem:[%s20 + $0x8] sm:$0xf]
    %v1592 = vld [vmem:[%s20 + $0xc] sm:$0xf]
    %v1593 = vld [vmem:[%s20 + $0x10] sm:$0xf]
    %v1594 = vld [vmem:[%s20 + $0x14] sm:$0xf]
    %v1595 = vld [vmem:[%s20 + $0x18] sm:$0xf]
    %v1596 = vld [vmem:[%s20 + $0x1c] sm:$0xf]
    %v1597 = vpack.c.bf16 %v1586, %v1585
    %v1598 = vpack.c.bf16 %v1588, %v1587
    %v1599 = vld [vmem:[%s21] sm:$0x1]
    %v1601 = vlaneseq
    %v1602 = vshrl.u32 %v1601, 7
    %v1603 = vsub.s32 0, %v1602
    %v1604 = vrot.slane %v1599, %v1603
    %v1614 = vunpack.c.l.b16 %v1589
    %v1615 = vunpack.c.l.b16 %v1590
    %v1616 = vunpack.c.l.b16 %v1591
    %v1617 = vunpack.c.l.b16 %v1592
    %v1618 = vunpack.c.l.b16 %v1593
    %v1619 = vunpack.c.l.b16 %v1594
    %v1620 = vunpack.c.l.b16 %v1595
    %v1621 = vunpack.c.l.b16 %v1596
    %v1622 = vpack.c.b16 %v1615, %v1614
    %v1623 = vpack.c.b16 %v1617, %v1616
    %v1624 = vpack.c.b16 %v1619, %v1618
    %v1625 = vpack.c.b16 %v1621, %v1620
    %v1631 = vsel %vm1369, %v1597, 0
    %v1634 = vsel %vm1369, %v1598, 0
    %1636 = vmatprep.subr.bf16.mxu0 0
    %1637 = vmatpush1.bf16.msra.mxu0 %v1622
    %1638 = vmatprep.subr.bf16.mxu0 0
    %1639 = vmatpush1.bf16.msra.mxu0 %v1623
    %1640 = vmatprep.subr.bf16.mxu0 0
    %1641 = vmatpush1.bf16.msra.mxu0 %v1624
    %1642 = vmatprep.subr.bf16.mxu0 0
    %1643 = vmatpush1.bf16.msra.mxu0 %v1625
    %1644 = vmatprep.subr.bf16.mxu0 0
    %1645 = vmatpush1.bf16.msra.mxu0 0
    %1646 = vmatprep.subr.bf16.mxu0 0
    %1647 = vmatpush1.bf16.msra.mxu0 0
    %1648 = vmatprep.subr.bf16.mxu0 0
    %1649 = vmatpush1.bf16.msra.mxu0 0
    %1650 = vmatprep.subr.bf16.mxu0 0
    %1651 = vmatpush1.bf16.msra.mxu0 0
    %1652 = vmatprep.subr.bf16.mxu0 0
    %1653 = vmatpush1.bf16.msra.mxu0 0
    %1654 = vmatprep.subr.bf16.mxu0 0
    %1655 = vmatpush1.bf16.msra.mxu0 0
    %1656 = vmatprep.subr.bf16.mxu0 0
    %1657 = vmatpush1.bf16.msra.mxu0 0
    %1658 = vmatprep.subr.bf16.mxu0 0
    %1659 = vmatpush1.bf16.msra.mxu0 0
    %1660 = vmatprep.subr.bf16.mxu0 0
    %1661 = vmatpush1.bf16.msra.mxu0 0
    %1662 = vmatprep.subr.bf16.mxu0 0
    %1663 = vmatpush1.bf16.msra.mxu0 0
    %1664 = vmatprep.subr.bf16.mxu0 0
    %1665 = vmatpush1.bf16.msra.mxu0 0
    %1666 = vmatprep.subr.bf16.mxu0 0
    %1667 = vmatpush1.bf16.msra.mxu0 0
    %1668 = vmatprep.mubr.bf16.mxu0 0
    %1669 = vmatmul.mubr.bf16.gmra.mrb[0].mxu0 %v1631
    %v1670 = vpop.f32.mrb[0].mxu0
    %v1671 = vadd.f32 %v1604, %v1670
    %v1672 = vpop.f32.mrb[0].mxu0
    %v1673 = vpop.f32.mrb[0].mxu0
    %v1674 = vadd.f32 %v1604, %v1673
    %v1675 = vpop.f32.mrb[0].mxu0
    %1676 = vmatprep.mubr.bf16.mxu0 0
    %1677 = vmatmul.mubr.bf16.gmra.mrb[0].mxu0 %v1634
    %v1678 = vpop.f32.mrb[0].mxu0
    %v1679 = vadd.f32 %v1604, %v1678
    %v1680 = vpop.f32.mrb[0].mxu0
    %v1681 = vpop.f32.mrb[0].mxu0
    %v1682 = vadd.f32 %v1604, %v1681
    %v1683 = vpop.f32.mrb[0].mxu0
    %1684 = vdwg.mxu0
    %1685 = vst.msk [vmem:[#allocation13] sm:$0xff] %vm1369, %v1671
    %1686 = vst.msk [vmem:[#allocation13 + $0x8] sm:$0xff] %vm1369, %v1674
    %1687 = vst.msk [vmem:[#allocation13 + $0x10] sm:$0xff] %vm1369, %v1679
    %1688 = vst.msk [vmem:[#allocation13 + $0x18] sm:$0xff] %vm1369, %v1682
    // Predicated region
    $region114: #{tpu_custom_call.1} parent=1 // pred_check
      _
    $region115: #{tpu_custom_call.1} parent=1 // pred_check_branch
      %1690 = sbr.rel (0) target = $region117
    $region116: #{tpu_custom_call.1} parent=1 // pred_region
      %s1692 = ssub.s32 512, 512
      %1693 = vsyncadd [#allocation4], %s1692
      %s1694 = sshll.u32 [#allocation13], 4
      %s1695 = int_to_ptr.vmem [resolvable:$true] %s1694
      %1700 = dma.vmem_to_hbm [thread:$0]  %s1695, 512, %s22, [#allocation4], 128, 128, 8
    $region117: #{tpu_custom_call.1} parent=1 // pred_fallthru
      _
    // Predicated region
    $region118: #{tpu_custom_call.1} parent=1 // pred_check
      _
    $region119: #{tpu_custom_call.1} parent=1 // pred_check_branch
      %1702 = sbr.rel (0) target = $region121
    $region120: #{tpu_custom_call.1} parent=1 // pred_region
      %1703 = dma.done [#allocation4], 512
    $region121: #{tpu_custom_call.1} parent=1 // pred_fallthru
      _
    %1704 = vsyncpa [#allocation3], 1
    %1705 = vsyncpa [#allocation6], 1
    %1706 = vsyncpa [#allocation9], 1
    %1707 = vsyncpa [#allocation12], 1
    %1708 = vsyncpa [#allocation4], 1

</llo_original>
